<compile_context>
chip_gen: v5e
topology: v5e:2x2
jax: 0.10.0
libtpu: 0.0.40
codegen_flags: <defaults>
</compile_context>

<pallas_src>
import functools

import jax
import jax.numpy as jnp
from jax.experimental import pallas as pl
from jax.experimental.pallas import tpu as pltpu

NEG_SLOPE = 0.2
BN_EPS = 1e-5
CPAD = 128          # lane-dense output-channel padding


# ----------------------------- Pallas kernels ------------------------------

def _leaky(x):
    return jnp.where(x >= 0, x, NEG_SLOPE * x)


def _conv_lrelu_kernel(x_ref, w_ref, b_ref, o_ref):
    # (bm, K) bf16 @ (K, 128) bf16 -> f32 accumulate, + bias, LeakyReLU, store.
    y = jnp.dot(x_ref[...], w_ref[...], preferred_element_type=jnp.float32)
    y = y + b_ref[...]
    o_ref[...] = _leaky(y).astype(o_ref.dtype)


def _conv_bn_lrelu_kernel(x_ref, w_ref, b_ref, g_ref, be_ref, o_ref, *, inv_m):
    # Single pass: conv(+bias) -> per-channel batch statistics over the whole
    # (M, 128) tile -> normalize (biased variance, eps=1e-5) -> affine ->
    # LeakyReLU.  Centered sum-of-squares avoids cancellation.
    y = jnp.dot(x_ref[...], w_ref[...], preferred_element_type=jnp.float32)
    y = y + b_ref[...]
    mean = jnp.sum(y, axis=0, keepdims=True) * inv_m
    yc = y - mean
    var = jnp.sum(yc * yc, axis=0, keepdims=True) * inv_m
    yn = yc * jax.lax.rsqrt(var + BN_EPS) * g_ref[...] + be_ref[...]
    o_ref[...] = _leaky(yn).astype(o_ref.dtype)


# ------------------------------- wrappers -----------------------------------

def _row_block(m, cap=512):
    # Single tile up to `cap` rows (v5e/v6e: one grid step beats pipelining at
    # this size).  On v7x, cap=256 would split layer 1 across the two TCs.
    if m <= cap:
        return m
    for bm in (512, 256, 128, 64, 32, 16, 8):
        if bm <= cap and m % bm == 0:
            return bm
    return m


def fused_conv_lrelu(patches, wmat, bias, out_dtype=jnp.bfloat16):
    """patches: (M, K) bf16, wmat: (K, CPAD) bf16, bias: (1, CPAD) f32."""
    M, K = patches.shape
    bm = _row_block(M)
    T = M // bm
    return pl.pallas_call(
        _conv_lrelu_kernel,
        out_shape=jax.ShapeDtypeStruct((M, CPAD), out_dtype),
        grid=(T,),
        in_specs=[
            pl.BlockSpec((bm, K), lambda i: (i, 0)),
            pl.BlockSpec((K, CPAD), lambda i: (0, 0)),
            pl.BlockSpec((1, CPAD), lambda i: (0, 0)),
        ],
        out_specs=pl.BlockSpec((bm, CPAD), lambda i: (i, 0)),
        compiler_params=pltpu.CompilerParams(
            dimension_semantics=("parallel",)),
    )(patches, wmat, bias)


def fused_conv_bn_lrelu(patches, wmat, bias, gamma, beta,
                        out_dtype=jnp.bfloat16):
    """Single-tile fused conv + training-mode BatchNorm + LeakyReLU.

    The entire (M, K) patch matrix, (K, 128) weight and (M, 128) output live
    in one VMEM block; batch statistics are computed locally in one pass, so
    no two-phase grid, no GEMM recomputation, no redundant writeback.
    """
    M, K = patches.shape
    kernel = functools.partial(_conv_bn_lrelu_kernel, inv_m=1.0 / M)
    return pl.pallas_call(
        kernel,
        out_shape=jax.ShapeDtypeStruct((M, CPAD), out_dtype),
        grid=(1,),
        in_specs=[
            pl.BlockSpec((M, K), lambda i: (0, 0)),
            pl.BlockSpec((K, CPAD), lambda i: (0, 0)),
            pl.BlockSpec((1, CPAD), lambda i: (0, 0)),
            pl.BlockSpec((1, CPAD), lambda i: (0, 0)),
            pl.BlockSpec((1, CPAD), lambda i: (0, 0)),
        ],
        out_specs=pl.BlockSpec((M, CPAD), lambda i: (0, 0)),
        compiler_params=pltpu.CompilerParams(
            dimension_semantics=("arbitrary",)),
    )(patches, wmat, bias, gamma, beta)


# ------------------------------ glue (JAX) ----------------------------------

def im2col_nhwc(x, k=4, stride=2, pad=1):
    """x: (N, H, W, C) -> (N*Ho*Wo, k*k*C) bf16, columns ordered (kh, kw, c)."""
    N, H, W, C = x.shape
    Ho = (H + 2 * pad - k) // stride + 1
    Wo = (W + 2 * pad - k) // stride + 1
    xp = jnp.pad(x, ((0, 0), (pad, pad), (pad, pad), (0, 0)))
    taps = []
    for kh in range(k):
        for kw in range(k):
            taps.append(xp[:, kh:kh + stride * (Ho - 1) + 1:stride,
                           kw:kw + stride * (Wo - 1) + 1:stride, :])
    cols = jnp.stack(taps, axis=3)             # (N, Ho, Wo, k*k, C)
    cols = cols.reshape(N * Ho * Wo, k * k * C)
    return cols.astype(jnp.bfloat16), (N, Ho, Wo)


def _pack_conv(w, b, gamma=None, beta=None, k=4):
    """Torch-layout (Cout, Cin, k, k) weight -> (k*k*Cin, CPAD) GEMM operand."""
    cout, cin = w.shape[0], w.shape[1]
    w4d = jnp.transpose(w, (2, 3, 1, 0))                  # (kh, kw, cin, cout)
    wmat = jnp.zeros((k * k * cin, CPAD), jnp.float32)
    wmat = wmat.at[:, :cout].set(w4d.reshape(k * k * cin, cout))
    wmat = wmat.astype(jnp.bfloat16)
    bp = jnp.zeros((1, CPAD), jnp.float32).at[0, :cout].set(b)
    if gamma is None:
        return wmat, bp, None, None
    gp = jnp.zeros((1, CPAD), jnp.float32).at[0, :cout].set(gamma)
    bep = jnp.zeros((1, CPAD), jnp.float32).at[0, :cout].set(beta)
    return wmat, bp, gp, bep


def pack_params(params):
    """Hoisted out of the jitted forward: repack / lane-pad all conv params
    once per parameter set (review: per-call pad/transpose glue removed)."""
    packed = {"fc_w": params["fc_w"], "fc_b": params["fc_b"]}
    for li in range(1, 5):
        g, be = params.get(f"g{li}"), params.get(f"beta{li}")
        wmat, bp, gp, bep = _pack_conv(params[f"w{li}"], params[f"b{li}"], g, be)
        packed[f"w{li}"] = wmat
        packed[f"b{li}"] = bp
        if gp is not None:
            packed[f"g{li}"] = gp
            packed[f"beta{li}"] = bep
    return packed


def discriminator_forward(x_nchw, packed, conv_dim):
    # Single layout conversion to NHWC; activations stay channel-last after.
    h = jnp.transpose(x_nchw, (0, 2, 3, 1))
    couts = (conv_dim, 2 * conv_dim, 4 * conv_dim, 8 * conv_dim)
    for li, cout in zip(range(1, 5), couts):
        patches, (N, Ho, Wo) = im2col_nhwc(h)
        out_dtype = jnp.float32 if li == 4 else jnp.bfloat16
        if li == 1:
            y = fused_conv_lrelu(patches, packed["w1"], packed["b1"],
                                 out_dtype=out_dtype)
        else:
            y = fused_conv_bn_lrelu(patches, packed[f"w{li}"],
                                    packed[f"b{li}"], packed[f"g{li}"],
                                    packed[f"beta{li}"], out_dtype=out_dtype)
        # Output stays lane-dense (CPAD wide) for the store, but only the real
        # channels are fed into the next layer's contraction axis.
        h = y.reshape(N, Ho, Wo, CPAD)[..., :cout]
    # FC head (2 x 256 x 1): plain jnp — a pallas_call here is launch overhead.
    h = jnp.transpose(h, (0, 3, 1, 2)).reshape(h.shape[0], -1)  # NCHW flatten
    return h @ packed["fc_w"].T + packed["fc_b"]
    # TODO(synk): at this size the remaining cost is 4 launches + XLA im2col
    # glue; a single VMEM-resident whole-network kernel (in-kernel strided
    # im2col) would remove it but is left out to keep lowering simple.


# ------------------------------ parameters -----------------------------------

def init_params(key, conv_dim):
    ks = jax.random.split(key, 10)
    p = {}
    dims = [(3, conv_dim), (conv_dim, 2 * conv_dim),
            (2 * conv_dim, 4 * conv_dim), (4 * conv_dim, 8 * conv_dim)]
    idx = 0
    for li, (cin, cout) in enumerate(dims, start=1):
        p[f"w{li}"] = jax.random.normal(ks[idx], (cout, cin, 4, 4),
                                        jnp.float32) / jnp.sqrt(cin * 16.0)
        idx += 1
        p[f"b{li}"] = 0.05 * jax.random.normal(ks[idx], (cout,), jnp.float32)
        idx += 1
        if li > 1:  # conv1 has batch_norm=False
            p[f"g{li}"] = jnp.ones((cout,), jnp.float32)       # BN weight
            p[f"beta{li}"] = jnp.zeros((cout,), jnp.float32)   # BN bias
    fc_in = conv_dim * 4 * 4 * 2
    p["fc_w"] = jax.random.normal(ks[idx], (1, fc_in),
                                  jnp.float32) / jnp.sqrt(float(fc_in))
    idx += 1
    p["fc_b"] = 0.05 * jax.random.normal(ks[idx], (1,), jnp.float32)
    return p


# --------------------------- pure-JAX reference ------------------------------

def reference_forward(x, params):
    # Precision-matched reference: convs use the same bf16-operand /
    # f32-accumulate MXU precision as the Pallas kernels.
    def conv2d(h, w, b):
        y = jax.lax.conv_general_dilated(
            h.astype(jnp.bfloat16), w.astype(jnp.bfloat16),
            window_strides=(2, 2), padding=((1, 1), (1, 1)),
            dimension_numbers=("NCHW", "OIHW", "NCHW"),
            preferred_element_type=jnp.float32)
        return y + b[None, :, None, None]

    def bn(h, g, be):
        mean = jnp.mean(h, axis=(0, 2, 3), keepdims=True)
        var = jnp.mean((h - mean) ** 2, axis=(0, 2, 3), keepdims=True)
        return (h - mean) * jax.lax.rsqrt(var + BN_EPS) * g[None, :, None, None] \
            + be[None, :, None, None]

    lrelu = lambda v: jnp.where(v >= 0, v, NEG_SLOPE * v)
    h = lrelu(conv2d(x, params["w1"], params["b1"]))
    h = lrelu(bn(conv2d(h, params["w2"], params["b2"]), params["g2"], params["beta2"]))
    h = lrelu(bn(conv2d(h, params["w3"], params["b3"]), params["g3"], params["beta3"]))
    h = lrelu(bn(conv2d(h, params["w4"], params["b4"]), params["g4"], params["beta4"]))
    h = h.reshape(h.shape[0], -1)
    return h @ params["fc_w"].T + params["fc_b"]


if __name__ == "__main__":
    conv_dim = 8
    key = jax.random.PRNGKey(0)
    kx, kp = jax.random.split(key)
    # fc expects conv_dim*8 channels at 2x2 spatial => input must be 3x32x32
    x = jax.random.normal(kx, (2, 3, 32, 32), jnp.float32)
    params = init_params(kp, conv_dim)
    packed = pack_params(params)          # hoisted: done once, outside the jit

    fwd = jax.jit(discriminator_forward, static_argnames="conv_dim")
    out = jax.block_until_ready(fwd(x, packed, conv_dim=conv_dim))
    assert out.shape == (2, 1)

    ref = jax.block_until_ready(reference_forward(x, params))
    if not jnp.allclose(out, ref, rtol=2e-2, atol=2e-2):
        raise AssertionError(f"Pallas/reference mismatch:\n{out}\nvs\n{ref}")

    # TODO(synk): BatchNorm running-stats update is a training side-effect and
    # is not part of the forward output, so it is not reproduced here.
    print("KERNEL_OK")
</pallas_src>

<mosaic_0001>
module attributes {stable_mosaic.version = 11 : i64} {
  func.func @_conv_lrelu_kernel(%arg0: i32, %arg1: memref<512x48xbf16, #tpu.memory_space<vmem>>, %arg2: memref<48x128xbf16, #tpu.memory_space<vmem>>, %arg3: memref<1x128xf32, #tpu.memory_space<vmem>>, %arg4: memref<512x128xbf16, #tpu.memory_space<vmem>>) attributes {dimension_semantics = [#tpu.dimension_semantics<parallel>], iteration_bounds = array<i64: 1>, scalar_prefetch = 0 : i64, scratch_operands = 0 : i64, tpu.core_type = #tpu.core_type<tc>, window_params = [{transform_indices = @transform_0, window_bounds = array<i64: 512, 48>}, {pipeline_mode = #tpu.pipeline_mode<synchronous>, transform_indices = @transform_1, window_bounds = array<i64: 48, 128>}, {pipeline_mode = #tpu.pipeline_mode<synchronous>, transform_indices = @transform_2, window_bounds = array<i64: 1, 128>}, {transform_indices = @transform_3, window_bounds = array<i64: 512, 128>}]} {
    %c0 = arith.constant 0 : index
    %c0_0 = arith.constant 0 : index
    %0 = vector.load %arg1[%c0, %c0_0] : memref<512x48xbf16, #tpu.memory_space<vmem>>, vector<512x48xbf16>
    %c0_1 = arith.constant 0 : index
    %c0_2 = arith.constant 0 : index
    %1 = vector.load %arg2[%c0_1, %c0_2] : memref<48x128xbf16, #tpu.memory_space<vmem>>, vector<48x128xbf16>
    %cst = arith.constant dense<0.000000e+00> : vector<512x128xf32>
    %2 = tpu.matmul %0, %1, %cst {dimension_numbers = #tpu.dot_dimension_numbers<[1], [0], [0], [1], [0, 0, 1, 1], [], []>} : vector<512x48xbf16>, vector<48x128xbf16>, vector<512x128xf32> -> vector<512x128xf32>
    %c0_3 = arith.constant 0 : index
    %c0_4 = arith.constant 0 : index
    %3 = vector.load %arg3[%c0_3, %c0_4] : memref<1x128xf32, #tpu.memory_space<vmem>>, vector<1x128xf32>
    %4 = vector.broadcast %3 : vector<1x128xf32> to vector<512x128xf32>
    %5 = arith.addf %2, %4 : vector<512x128xf32>
    %cst_5 = arith.constant 0.000000e+00 : f32
    %6 = vector.broadcast %cst_5 : f32 to vector<512x128xf32>
    %7 = arith.cmpf oge, %5, %6 : vector<512x128xf32>
    %cst_6 = arith.constant 2.000000e-01 : f32
    %8 = vector.broadcast %cst_6 : f32 to vector<512x128xf32>
    %9 = arith.mulf %8, %5 : vector<512x128xf32>
    %10 = arith.select %7, %5, %9 : vector<512x128xi1>, vector<512x128xf32>
    %11 = arith.truncf %10 : vector<512x128xf32> to vector<512x128xbf16>
    %c0_7 = arith.constant 0 : index
    %c0_8 = arith.constant 0 : index
    %12 = vector.load %arg4[%c0_7, %c0_8] : memref<512x128xbf16, #tpu.memory_space<vmem>>, vector<512x128xbf16>
    tpu.vector_store %arg4[%c0_7, %c0_8], %11 {strides = array<i32>} : memref<512x128xbf16, #tpu.memory_space<vmem>>, vector<512x128xbf16>,
    return
  }
  func.func @transform_0(%arg0: i32) -> (i32, i32) {
    %c0_i32 = arith.constant 0 : i32
    %c0_i32_0 = arith.constant 0 : i32
    return %arg0, %c0_i32 : i32, i32
  }
  func.func @transform_1(%arg0: i32) -> (i32, i32) {
    %c0_i32 = arith.constant 0 : i32
    %c0_i32_0 = arith.constant 0 : i32
    %c0_i32_1 = arith.constant 0 : i32
    return %c0_i32, %c0_i32_0 : i32, i32
  }
  func.func @transform_2(%arg0: i32) -> (i32, i32) {
    %c0_i32 = arith.constant 0 : i32
    %c0_i32_0 = arith.constant 0 : i32
    %c0_i32_1 = arith.constant 0 : i32
    return %c0_i32, %c0_i32_0 : i32, i32
  }
  func.func @transform_3(%arg0: i32) -> (i32, i32) {
    %c0_i32 = arith.constant 0 : i32
    %c0_i32_0 = arith.constant 0 : i32
    return %arg0, %c0_i32 : i32, i32
  }
}

module attributes {stable_mosaic.version = 11 : i64} {
  func.func @_conv_bn_lrelu_kernel(%arg0: i32, %arg1: memref<128x128xbf16, #tpu.memory_space<vmem>>, %arg2: memref<128x128xbf16, #tpu.memory_space<vmem>>, %arg3: memref<1x128xf32, #tpu.memory_space<vmem>>, %arg4: memref<1x128xf32, #tpu.memory_space<vmem>>, %arg5: memref<1x128xf32, #tpu.memory_space<vmem>>, %arg6: memref<128x128xbf16, #tpu.memory_space<vmem>>) attributes {dimension_semantics = [#tpu.dimension_semantics<arbitrary>], iteration_bounds = array<i64: 1>, scalar_prefetch = 0 : i64, scratch_operands = 0 : i64, tpu.core_type = #tpu.core_type<tc>, window_params = [{pipeline_mode = #tpu.pipeline_mode<synchronous>, transform_indices = @transform_0, window_bounds = array<i64: 128, 128>}, {pipeline_mode = #tpu.pipeline_mode<synchronous>, transform_indices = @transform_1, window_bounds = array<i64: 128, 128>}, {pipeline_mode = #tpu.pipeline_mode<synchronous>, transform_indices = @transform_2, window_bounds = array<i64: 1, 128>}, {pipeline_mode = #tpu.pipeline_mode<synchronous>, transform_indices = @transform_3, window_bounds = array<i64: 1, 128>}, {pipeline_mode = #tpu.pipeline_mode<synchronous>, transform_indices = @transform_4, window_bounds = array<i64: 1, 128>}, {pipeline_mode = #tpu.pipeline_mode<synchronous>, transform_indices = @transform_5, window_bounds = array<i64: 128, 128>}]} {
    %c0 = arith.constant 0 : index
    %c0_0 = arith.constant 0 : index
    %0 = vector.load %arg1[%c0, %c0_0] : memref<128x128xbf16, #tpu.memory_space<vmem>>, vector<128x128xbf16>
    %c0_1 = arith.constant 0 : index
    %c0_2 = arith.constant 0 : index
    %1 = vector.load %arg2[%c0_1, %c0_2] : memref<128x128xbf16, #tpu.memory_space<vmem>>, vector<128x128xbf16>
    %cst = arith.constant dense<0.000000e+00> : vector<128x128xf32>
    %2 = tpu.matmul %0, %1, %cst {dimension_numbers = #tpu.dot_dimension_numbers<[1], [0], [0], [1], [0, 0, 1, 1], [], []>} : vector<128x128xbf16>, vector<128x128xbf16>, vector<128x128xf32> -> vector<128x128xf32>
    %c0_3 = arith.constant 0 : index
    %c0_4 = arith.constant 0 : index
    %3 = vector.load %arg3[%c0_3, %c0_4] : memref<1x128xf32, #tpu.memory_space<vmem>>, vector<1x128xf32>
    %4 = vector.broadcast %3 : vector<1x128xf32> to vector<128x128xf32>
    %5 = arith.addf %2, %4 : vector<128x128xf32>
    %cst_5 = arith.constant dense<0.000000e+00> : vector<128xf32>
    %6 = vector.multi_reduction <add>, %5, %cst_5 [0] : vector<128x128xf32> to vector<128xf32>
    %7 = vector.shape_cast %6 : vector<128xf32> to vector<1x128xf32>
    %cst_6 = arith.constant 7.812500e-03 : f32
    %8 = vector.broadcast %cst_6 : f32 to vector<1x128xf32>
    %9 = arith.mulf %7, %8 : vector<1x128xf32>
    %10 = vector.broadcast %9 : vector<1x128xf32> to vector<128x128xf32>
    %11 = arith.subf %5, %10 : vector<128x128xf32>
    %12 = arith.mulf %11, %11 : vector<128x128xf32>
    %cst_7 = arith.constant dense<0.000000e+00> : vector<128xf32>
    %13 = vector.multi_reduction <add>, %12, %cst_7 [0] : vector<128x128xf32> to vector<128xf32>
    %14 = vector.shape_cast %13 : vector<128xf32> to vector<1x128xf32>
    %cst_8 = arith.constant 7.812500e-03 : f32
    %15 = vector.broadcast %cst_8 : f32 to vector<1x128xf32>
    %16 = arith.mulf %14, %15 : vector<1x128xf32>
    %cst_9 = arith.constant 9.99999974E-6 : f32
    %17 = vector.broadcast %cst_9 : f32 to vector<1x128xf32>
    %18 = arith.addf %16, %17 : vector<1x128xf32>
    %19 = math.rsqrt %18 : vector<1x128xf32>
    %20 = vector.broadcast %19 : vector<1x128xf32> to vector<128x128xf32>
    %21 = arith.mulf %11, %20 : vector<128x128xf32>
    %c0_10 = arith.constant 0 : index
    %c0_11 = arith.constant 0 : index
    %22 = vector.load %arg4[%c0_10, %c0_11] : memref<1x128xf32, #tpu.memory_space<vmem>>, vector<1x128xf32>
    %23 = vector.broadcast %22 : vector<1x128xf32> to vector<128x128xf32>
    %24 = arith.mulf %21, %23 : vector<128x128xf32>
    %c0_12 = arith.constant 0 : index
    %c0_13 = arith.constant 0 : index
    %25 = vector.load %arg5[%c0_12, %c0_13] : memref<1x128xf32, #tpu.memory_space<vmem>>, vector<1x128xf32>
    %26 = vector.broadcast %25 : vector<1x128xf32> to vector<128x128xf32>
    %27 = arith.addf %24, %26 : vector<128x128xf32>
    %cst_14 = arith.constant 0.000000e+00 : f32
    %28 = vector.broadcast %cst_14 : f32 to vector<128x128xf32>
    %29 = arith.cmpf oge, %27, %28 : vector<128x128xf32>
    %cst_15 = arith.constant 2.000000e-01 : f32
    %30 = vector.broadcast %cst_15 : f32 to vector<128x128xf32>
    %31 = arith.mulf %30, %27 : vector<128x128xf32>
    %32 = arith.select %29, %27, %31 : vector<128x128xi1>, vector<128x128xf32>
    %33 = arith.truncf %32 : vector<128x128xf32> to vector<128x128xbf16>
    %c0_16 = arith.constant 0 : index
    %c0_17 = arith.constant 0 : index
    %34 = vector.load %arg6[%c0_16, %c0_17] : memref<128x128xbf16, #tpu.memory_space<vmem>>, vector<128x128xbf16>
    tpu.vector_store %arg6[%c0_16, %c0_17], %33 {strides = array<i32>} : memref<128x128xbf16, #tpu.memory_space<vmem>>, vector<128x128xbf16>,
    return
  }
  func.func @transform_0(%arg0: i32) -> (i32, i32) {
    %c0_i32 = arith.constant 0 : i32
    %c0_i32_0 = arith.constant 0 : i32
    %c0_i32_1 = arith.constant 0 : i32
    return %c0_i32, %c0_i32_0 : i32, i32
  }
  func.func @transform_1(%arg0: i32) -> (i32, i32) {
    %c0_i32 = arith.constant 0 : i32
    %c0_i32_0 = arith.constant 0 : i32
    %c0_i32_1 = arith.constant 0 : i32
    return %c0_i32, %c0_i32_0 : i32, i32
  }
  func.func @transform_2(%arg0: i32) -> (i32, i32) {
    %c0_i32 = arith.constant 0 : i32
    %c0_i32_0 = arith.constant 0 : i32
    %c0_i32_1 = arith.constant 0 : i32
    return %c0_i32, %c0_i32_0 : i32, i32
  }
  func.func @transform_3(%arg0: i32) -> (i32, i32) {
    %c0_i32 = arith.constant 0 : i32
    %c0_i32_0 = arith.constant 0 : i32
    %c0_i32_1 = arith.constant 0 : i32
    return %c0_i32, %c0_i32_0 : i32, i32
  }
  func.func @transform_4(%arg0: i32) -> (i32, i32) {
    %c0_i32 = arith.constant 0 : i32
    %c0_i32_0 = arith.constant 0 : i32
    %c0_i32_1 = arith.constant 0 : i32
    return %c0_i32, %c0_i32_0 : i32, i32
  }
  func.func @transform_5(%arg0: i32) -> (i32, i32) {
    %c0_i32 = arith.constant 0 : i32
    %c0_i32_0 = arith.constant 0 : i32
    %c0_i32_1 = arith.constant 0 : i32
    return %c0_i32, %c0_i32_0 : i32, i32
  }
}

module attributes {stable_mosaic.version = 11 : i64} {
  func.func @_conv_bn_lrelu_kernel(%arg0: i32, %arg1: memref<32x256xbf16, #tpu.memory_space<vmem>>, %arg2: memref<256x128xbf16, #tpu.memory_space<vmem>>, %arg3: memref<1x128xf32, #tpu.memory_space<vmem>>, %arg4: memref<1x128xf32, #tpu.memory_space<vmem>>, %arg5: memref<1x128xf32, #tpu.memory_space<vmem>>, %arg6: memref<32x128xbf16, #tpu.memory_space<vmem>>) attributes {dimension_semantics = [#tpu.dimension_semantics<arbitrary>], iteration_bounds = array<i64: 1>, scalar_prefetch = 0 : i64, scratch_operands = 0 : i64, tpu.core_type = #tpu.core_type<tc>, window_params = [{pipeline_mode = #tpu.pipeline_mode<synchronous>, transform_indices = @transform_0, window_bounds = array<i64: 32, 256>}, {pipeline_mode = #tpu.pipeline_mode<synchronous>, transform_indices = @transform_1, window_bounds = array<i64: 256, 128>}, {pipeline_mode = #tpu.pipeline_mode<synchronous>, transform_indices = @transform_2, window_bounds = array<i64: 1, 128>}, {pipeline_mode = #tpu.pipeline_mode<synchronous>, transform_indices = @transform_3, window_bounds = array<i64: 1, 128>}, {pipeline_mode = #tpu.pipeline_mode<synchronous>, transform_indices = @transform_4, window_bounds = array<i64: 1, 128>}, {pipeline_mode = #tpu.pipeline_mode<synchronous>, transform_indices = @transform_5, window_bounds = array<i64: 32, 128>}]} {
    %c0 = arith.constant 0 : index
    %c0_0 = arith.constant 0 : index
    %0 = vector.load %arg1[%c0, %c0_0] : memref<32x256xbf16, #tpu.memory_space<vmem>>, vector<32x256xbf16>
    %c0_1 = arith.constant 0 : index
    %c0_2 = arith.constant 0 : index
    %1 = vector.load %arg2[%c0_1, %c0_2] : memref<256x128xbf16, #tpu.memory_space<vmem>>, vector<256x128xbf16>
    %cst = arith.constant dense<0.000000e+00> : vector<32x128xf32>
    %2 = tpu.matmul %0, %1, %cst {dimension_numbers = #tpu.dot_dimension_numbers<[1], [0], [0], [1], [0, 0, 1, 1], [], []>} : vector<32x256xbf16>, vector<256x128xbf16>, vector<32x128xf32> -> vector<32x128xf32>
    %c0_3 = arith.constant 0 : index
    %c0_4 = arith.constant 0 : index
    %3 = vector.load %arg3[%c0_3, %c0_4] : memref<1x128xf32, #tpu.memory_space<vmem>>, vector<1x128xf32>
    %4 = vector.broadcast %3 : vector<1x128xf32> to vector<32x128xf32>
    %5 = arith.addf %2, %4 : vector<32x128xf32>
    %cst_5 = arith.constant dense<0.000000e+00> : vector<128xf32>
    %6 = vector.multi_reduction <add>, %5, %cst_5 [0] : vector<32x128xf32> to vector<128xf32>
    %7 = vector.shape_cast %6 : vector<128xf32> to vector<1x128xf32>
    %cst_6 = arith.constant 3.125000e-02 : f32
    %8 = vector.broadcast %cst_6 : f32 to vector<1x128xf32>
    %9 = arith.mulf %7, %8 : vector<1x128xf32>
    %10 = vector.broadcast %9 : vector<1x128xf32> to vector<32x128xf32>
    %11 = arith.subf %5, %10 : vector<32x128xf32>
    %12 = arith.mulf %11, %11 : vector<32x128xf32>
    %cst_7 = arith.constant dense<0.000000e+00> : vector<128xf32>
    %13 = vector.multi_reduction <add>, %12, %cst_7 [0] : vector<32x128xf32> to vector<128xf32>
    %14 = vector.shape_cast %13 : vector<128xf32> to vector<1x128xf32>
    %cst_8 = arith.constant 3.125000e-02 : f32
    %15 = vector.broadcast %cst_8 : f32 to vector<1x128xf32>
    %16 = arith.mulf %14, %15 : vector<1x128xf32>
    %cst_9 = arith.constant 9.99999974E-6 : f32
    %17 = vector.broadcast %cst_9 : f32 to vector<1x128xf32>
    %18 = arith.addf %16, %17 : vector<1x128xf32>
    %19 = math.rsqrt %18 : vector<1x128xf32>
    %20 = vector.broadcast %19 : vector<1x128xf32> to vector<32x128xf32>
    %21 = arith.mulf %11, %20 : vector<32x128xf32>
    %c0_10 = arith.constant 0 : index
    %c0_11 = arith.constant 0 : index
    %22 = vector.load %arg4[%c0_10, %c0_11] : memref<1x128xf32, #tpu.memory_space<vmem>>, vector<1x128xf32>
    %23 = vector.broadcast %22 : vector<1x128xf32> to vector<32x128xf32>
    %24 = arith.mulf %21, %23 : vector<32x128xf32>
    %c0_12 = arith.constant 0 : index
    %c0_13 = arith.constant 0 : index
    %25 = vector.load %arg5[%c0_12, %c0_13] : memref<1x128xf32, #tpu.memory_space<vmem>>, vector<1x128xf32>
    %26 = vector.broadcast %25 : vector<1x128xf32> to vector<32x128xf32>
    %27 = arith.addf %24, %26 : vector<32x128xf32>
    %cst_14 = arith.constant 0.000000e+00 : f32
    %28 = vector.broadcast %cst_14 : f32 to vector<32x128xf32>
    %29 = arith.cmpf oge, %27, %28 : vector<32x128xf32>
    %cst_15 = arith.constant 2.000000e-01 : f32
    %30 = vector.broadcast %cst_15 : f32 to vector<32x128xf32>
    %31 = arith.mulf %30, %27 : vector<32x128xf32>
    %32 = arith.select %29, %27, %31 : vector<32x128xi1>, vector<32x128xf32>
    %33 = arith.truncf %32 : vector<32x128xf32> to vector<32x128xbf16>
    %c0_16 = arith.constant 0 : index
    %c0_17 = arith.constant 0 : index
    %34 = vector.load %arg6[%c0_16, %c0_17] : memref<32x128xbf16, #tpu.memory_space<vmem>>, vector<32x128xbf16>
    tpu.vector_store %arg6[%c0_16, %c0_17], %33 {strides = array<i32>} : memref<32x128xbf16, #tpu.memory_space<vmem>>, vector<32x128xbf16>,
    return
  }
  func.func @transform_0(%arg0: i32) -> (i32, i32) {
    %c0_i32 = arith.constant 0 : i32
    %c0_i32_0 = arith.constant 0 : i32
    %c0_i32_1 = arith.constant 0 : i32
    return %c0_i32, %c0_i32_0 : i32, i32
  }
  func.func @transform_1(%arg0: i32) -> (i32, i32) {
    %c0_i32 = arith.constant 0 : i32
    %c0_i32_0 = arith.constant 0 : i32
    %c0_i32_1 = arith.constant 0 : i32
    return %c0_i32, %c0_i32_0 : i32, i32
  }
  func.func @transform_2(%arg0: i32) -> (i32, i32) {
    %c0_i32 = arith.constant 0 : i32
    %c0_i32_0 = arith.constant 0 : i32
    %c0_i32_1 = arith.constant 0 : i32
    return %c0_i32, %c0_i32_0 : i32, i32
  }
  func.func @transform_3(%arg0: i32) -> (i32, i32) {
    %c0_i32 = arith.constant 0 : i32
    %c0_i32_0 = arith.constant 0 : i32
    %c0_i32_1 = arith.constant 0 : i32
    return %c0_i32, %c0_i32_0 : i32, i32
  }
  func.func @transform_4(%arg0: i32) -> (i32, i32) {
    %c0_i32 = arith.constant 0 : i32
    %c0_i32_0 = arith.constant 0 : i32
    %c0_i32_1 = arith.constant 0 : i32
    return %c0_i32, %c0_i32_0 : i32, i32
  }
  func.func @transform_5(%arg0: i32) -> (i32, i32) {
    %c0_i32 = arith.constant 0 : i32
    %c0_i32_0 = arith.constant 0 : i32
    %c0_i32_1 = arith.constant 0 : i32
    return %c0_i32, %c0_i32_0 : i32, i32
  }
}

module attributes {stable_mosaic.version = 11 : i64} {
  func.func @_conv_bn_lrelu_kernel(%arg0: i32, %arg1: memref<8x512xbf16, #tpu.memory_space<vmem>>, %arg2: memref<512x128xbf16, #tpu.memory_space<vmem>>, %arg3: memref<1x128xf32, #tpu.memory_space<vmem>>, %arg4: memref<1x128xf32, #tpu.memory_space<vmem>>, %arg5: memref<1x128xf32, #tpu.memory_space<vmem>>, %arg6: memref<8x128xf32, #tpu.memory_space<vmem>>) attributes {dimension_semantics = [#tpu.dimension_semantics<arbitrary>], iteration_bounds = array<i64: 1>, scalar_prefetch = 0 : i64, scratch_operands = 0 : i64, tpu.core_type = #tpu.core_type<tc>, window_params = [{pipeline_mode = #tpu.pipeline_mode<synchronous>, transform_indices = @transform_0, window_bounds = array<i64: 8, 512>}, {pipeline_mode = #tpu.pipeline_mode<synchronous>, transform_indices = @transform_1, window_bounds = array<i64: 512, 128>}, {pipeline_mode = #tpu.pipeline_mode<synchronous>, transform_indices = @transform_2, window_bounds = array<i64: 1, 128>}, {pipeline_mode = #tpu.pipeline_mode<synchronous>, transform_indices = @transform_3, window_bounds = array<i64: 1, 128>}, {pipeline_mode = #tpu.pipeline_mode<synchronous>, transform_indices = @transform_4, window_bounds = array<i64: 1, 128>}, {pipeline_mode = #tpu.pipeline_mode<synchronous>, transform_indices = @transform_5, window_bounds = array<i64: 8, 128>}]} {
    %c0 = arith.constant 0 : index
    %c0_0 = arith.constant 0 : index
    %0 = vector.load %arg1[%c0, %c0_0] : memref<8x512xbf16, #tpu.memory_space<vmem>>, vector<8x512xbf16>
    %c0_1 = arith.constant 0 : index
    %c0_2 = arith.constant 0 : index
    %1 = vector.load %arg2[%c0_1, %c0_2] : memref<512x128xbf16, #tpu.memory_space<vmem>>, vector<512x128xbf16>
    %cst = arith.constant dense<0.000000e+00> : vector<8x128xf32>
    %2 = tpu.matmul %0, %1, %cst {dimension_numbers = #tpu.dot_dimension_numbers<[1], [0], [0], [1], [0, 0, 1, 1], [], []>} : vector<8x512xbf16>, vector<512x128xbf16>, vector<8x128xf32> -> vector<8x128xf32>
    %c0_3 = arith.constant 0 : index
    %c0_4 = arith.constant 0 : index
    %3 = vector.load %arg3[%c0_3, %c0_4] : memref<1x128xf32, #tpu.memory_space<vmem>>, vector<1x128xf32>
    %4 = vector.broadcast %3 : vector<1x128xf32> to vector<8x128xf32>
    %5 = arith.addf %2, %4 : vector<8x128xf32>
    %cst_5 = arith.constant dense<0.000000e+00> : vector<128xf32>
    %6 = vector.multi_reduction <add>, %5, %cst_5 [0] : vector<8x128xf32> to vector<128xf32>
    %7 = vector.shape_cast %6 : vector<128xf32> to vector<1x128xf32>
    %cst_6 = arith.constant 1.250000e-01 : f32
    %8 = vector.broadcast %cst_6 : f32 to vector<1x128xf32>
    %9 = arith.mulf %7, %8 : vector<1x128xf32>
    %10 = vector.broadcast %9 : vector<1x128xf32> to vector<8x128xf32>
    %11 = arith.subf %5, %10 : vector<8x128xf32>
    %12 = arith.mulf %11, %11 : vector<8x128xf32>
    %cst_7 = arith.constant dense<0.000000e+00> : vector<128xf32>
    %13 = vector.multi_reduction <add>, %12, %cst_7 [0] : vector<8x128xf32> to vector<128xf32>
    %14 = vector.shape_cast %13 : vector<128xf32> to vector<1x128xf32>
    %cst_8 = arith.constant 1.250000e-01 : f32
    %15 = vector.broadcast %cst_8 : f32 to vector<1x128xf32>
    %16 = arith.mulf %14, %15 : vector<1x128xf32>
    %cst_9 = arith.constant 9.99999974E-6 : f32
    %17 = vector.broadcast %cst_9 : f32 to vector<1x128xf32>
    %18 = arith.addf %16, %17 : vector<1x128xf32>
    %19 = math.rsqrt %18 : vector<1x128xf32>
    %20 = vector.broadcast %19 : vector<1x128xf32> to vector<8x128xf32>
    %21 = arith.mulf %11, %20 : vector<8x128xf32>
    %c0_10 = arith.constant 0 : index
    %c0_11 = arith.constant 0 : index
    %22 = vector.load %arg4[%c0_10, %c0_11] : memref<1x128xf32, #tpu.memory_space<vmem>>, vector<1x128xf32>
    %23 = vector.broadcast %22 : vector<1x128xf32> to vector<8x128xf32>
    %24 = arith.mulf %21, %23 : vector<8x128xf32>
    %c0_12 = arith.constant 0 : index
    %c0_13 = arith.constant 0 : index
    %25 = vector.load %arg5[%c0_12, %c0_13] : memref<1x128xf32, #tpu.memory_space<vmem>>, vector<1x128xf32>
    %26 = vector.broadcast %25 : vector<1x128xf32> to vector<8x128xf32>
    %27 = arith.addf %24, %26 : vector<8x128xf32>
    %cst_14 = arith.constant 0.000000e+00 : f32
    %28 = vector.broadcast %cst_14 : f32 to vector<8x128xf32>
    %29 = arith.cmpf oge, %27, %28 : vector<8x128xf32>
    %cst_15 = arith.constant 2.000000e-01 : f32
    %30 = vector.broadcast %cst_15 : f32 to vector<8x128xf32>
    %31 = arith.mulf %30, %27 : vector<8x128xf32>
    %32 = arith.select %29, %27, %31 : vector<8x128xi1>, vector<8x128xf32>
    %c0_16 = arith.constant 0 : index
    %c0_17 = arith.constant 0 : index
    %33 = vector.load %arg6[%c0_16, %c0_17] : memref<8x128xf32, #tpu.memory_space<vmem>>, vector<8x128xf32>
    tpu.vector_store %arg6[%c0_16, %c0_17], %32 {strides = array<i32>} : memref<8x128xf32, #tpu.memory_space<vmem>>, vector<8x128xf32>,
    return
  }
  func.func @transform_0(%arg0: i32) -> (i32, i32) {
    %c0_i32 = arith.constant 0 : i32
    %c0_i32_0 = arith.constant 0 : i32
    %c0_i32_1 = arith.constant 0 : i32
    return %c0_i32, %c0_i32_0 : i32, i32
  }
  func.func @transform_1(%arg0: i32) -> (i32, i32) {
    %c0_i32 = arith.constant 0 : i32
    %c0_i32_0 = arith.constant 0 : i32
    %c0_i32_1 = arith.constant 0 : i32
    return %c0_i32, %c0_i32_0 : i32, i32
  }
  func.func @transform_2(%arg0: i32) -> (i32, i32) {
    %c0_i32 = arith.constant 0 : i32
    %c0_i32_0 = arith.constant 0 : i32
    %c0_i32_1 = arith.constant 0 : i32
    return %c0_i32, %c0_i32_0 : i32, i32
  }
  func.func @transform_3(%arg0: i32) -> (i32, i32) {
    %c0_i32 = arith.constant 0 : i32
    %c0_i32_0 = arith.constant 0 : i32
    %c0_i32_1 = arith.constant 0 : i32
    return %c0_i32, %c0_i32_0 : i32, i32
  }
  func.func @transform_4(%arg0: i32) -> (i32, i32) {
    %c0_i32 = arith.constant 0 : i32
    %c0_i32_0 = arith.constant 0 : i32
    %c0_i32_1 = arith.constant 0 : i32
    return %c0_i32, %c0_i32_0 : i32, i32
  }
  func.func @transform_5(%arg0: i32) -> (i32, i32) {
    %c0_i32 = arith.constant 0 : i32
    %c0_i32_0 = arith.constant 0 : i32
    %c0_i32_1 = arith.constant 0 : i32
    return %c0_i32, %c0_i32_0 : i32, i32
  }
}

</mosaic_0001>

<llo_original>
// kernel: discriminator_forward.4
$region0: #{discriminator_forward.4}
  #allocation0 [shape = 'u32[]', space=smem, size = 0x4, offset = 0x4, fixed_abs, tag = 'smem constant byte address 0x4 - core index']
  #allocation1 [shape = 'u32[72,128]{1,0:T(1,128)}', space=vmem, size = 0x9000, scoped, tag = 'internal scratch']
  %s0 = inlined_call_operand.vmem [shape: bf16[512,48], index: 0, kind: input, shape index: {}]
  %s1 = inlined_call_operand.vmem [shape: bf16[48,128], index: 1, kind: input, shape index: {}]
  %s2 = inlined_call_operand.vmem [shape: f32[1,128], index: 2, kind: input, shape index: {}]
  %s3 = inlined_call_operand.vmem [shape: bf16[512,128], index: 3, kind: output, shape index: {}]
  %s4 = sld [smem:[#allocation0]]
  $region22: #{discriminator_forward.4} parent=0
    _
  %s6 = ssub.s32 1, %s4
  %s7 = scalar_select 0, %s6, %s4
  // Predicated region
  $region2: #{discriminator_forward.4} parent=0 // pred_check
    _
  $region3: #{discriminator_forward.4} parent=0 // pred_check_branch
    %9 = sbr.rel (0) target = $region5
  $region4: #{discriminator_forward.4} parent=0 // pred_region
    _
  $region5: #{discriminator_forward.4} parent=0 // pred_fallthru
    _
  // Predicated region
  $region6: #{discriminator_forward.4} parent=0 // pred_check
    _
  $region7: #{discriminator_forward.4} parent=0 // pred_check_branch
    %11 = sbr.rel (0) target = $region9
  $region8: #{discriminator_forward.4} parent=0 // pred_region
    _
  $region9: #{discriminator_forward.4} parent=0 // pred_fallthru
    _
  // Predicated region
  $region10: #{discriminator_forward.4} parent=0 // pred_check
    _
  $region11: #{discriminator_forward.4} parent=0 // pred_check_branch
    %13 = sbr.rel (0) target = $region13
  $region12: #{discriminator_forward.4} parent=0 // pred_region
    _
  $region13: #{discriminator_forward.4} parent=0 // pred_fallthru
    _
  %v15 = vld [vmem:[%s0] sm:$0xf]
  %v16 = vld [vmem:[%s0 + $0x4] sm:$0xf]
  %v17 = vld [vmem:[%s0 + $0x8] sm:$0xf]
  %v18 = vld [vmem:[%s0 + $0xc] sm:$0xf]
  %v19 = vld [vmem:[%s0 + $0x10] sm:$0xf]
  %v20 = vld [vmem:[%s0 + $0x14] sm:$0xf]
  %v21 = vld [vmem:[%s0 + $0x18] sm:$0xf]
  %v22 = vld [vmem:[%s0 + $0x1c] sm:$0xf]
  %v23 = vld [vmem:[%s0 + $0x20] sm:$0xf]
  %v24 = vld [vmem:[%s0 + $0x24] sm:$0xf]
  %v25 = vld [vmem:[%s0 + $0x28] sm:$0xf]
  %v26 = vld [vmem:[%s0 + $0x2c] sm:$0xf]
  %v27 = vld [vmem:[%s0 + $0x30] sm:$0xf]
  %v28 = vld [vmem:[%s0 + $0x34] sm:$0xf]
  %v29 = vld [vmem:[%s0 + $0x38] sm:$0xf]
  %v30 = vld [vmem:[%s0 + $0x3c] sm:$0xf]
  %v31 = vld [vmem:[%s0 + $0x40] sm:$0xf]
  %v32 = vld [vmem:[%s0 + $0x44] sm:$0xf]
  %v33 = vld [vmem:[%s0 + $0x48] sm:$0xf]
  %v34 = vld [vmem:[%s0 + $0x4c] sm:$0xf]
  %v35 = vld [vmem:[%s0 + $0x50] sm:$0xf]
  %v36 = vld [vmem:[%s0 + $0x54] sm:$0xf]
  %v37 = vld [vmem:[%s0 + $0x58] sm:$0xf]
  %v38 = vld [vmem:[%s0 + $0x5c] sm:$0xf]
  %v39 = vld [vmem:[%s0 + $0x60] sm:$0xf]
  %v40 = vld [vmem:[%s0 + $0x64] sm:$0xf]
  %v41 = vld [vmem:[%s0 + $0x68] sm:$0xf]
  %v42 = vld [vmem:[%s0 + $0x6c] sm:$0xf]
  %v43 = vld [vmem:[%s0 + $0x70] sm:$0xf]
  %v44 = vld [vmem:[%s0 + $0x74] sm:$0xf]
  %v45 = vld [vmem:[%s0 + $0x78] sm:$0xf]
  %v46 = vld [vmem:[%s0 + $0x7c] sm:$0xf]
  %v47 = vld [vmem:[%s0 + $0x80] sm:$0xf]
  %v48 = vld [vmem:[%s0 + $0x84] sm:$0xf]
  %v49 = vld [vmem:[%s0 + $0x88] sm:$0xf]
  %v50 = vld [vmem:[%s0 + $0x8c] sm:$0xf]
  %v51 = vld [vmem:[%s0 + $0x90] sm:$0xf]
  %v52 = vld [vmem:[%s0 + $0x94] sm:$0xf]
  %v53 = vld [vmem:[%s0 + $0x98] sm:$0xf]
  %v54 = vld [vmem:[%s0 + $0x9c] sm:$0xf]
  %v55 = vld [vmem:[%s0 + $0xa0] sm:$0xf]
  %v56 = vld [vmem:[%s0 + $0xa4] sm:$0xf]
  %v57 = vld [vmem:[%s0 + $0xa8] sm:$0xf]
  %v58 = vld [vmem:[%s0 + $0xac] sm:$0xf]
  %v59 = vld [vmem:[%s0 + $0xb0] sm:$0xf]
  %v60 = vld [vmem:[%s0 + $0xb4] sm:$0xf]
  %v61 = vld [vmem:[%s0 + $0xb8] sm:$0xf]
  %v62 = vld [vmem:[%s0 + $0xbc] sm:$0xf]
  %v63 = vld [vmem:[%s0 + $0xc0] sm:$0xf]
  %v64 = vld [vmem:[%s0 + $0xc4] sm:$0xf]
  %v65 = vld [vmem:[%s0 + $0xc8] sm:$0xf]
  %v66 = vld [vmem:[%s0 + $0xcc] sm:$0xf]
  %v67 = vld [vmem:[%s0 + $0xd0] sm:$0xf]
  %v68 = vld [vmem:[%s0 + $0xd4] sm:$0xf]
  %v69 = vld [vmem:[%s0 + $0xd8] sm:$0xf]
  %v70 = vld [vmem:[%s0 + $0xdc] sm:$0xf]
  %v71 = vld [vmem:[%s0 + $0xe0] sm:$0xf]
  %v72 = vld [vmem:[%s0 + $0xe4] sm:$0xf]
  %v73 = vld [vmem:[%s0 + $0xe8] sm:$0xf]
  %v74 = vld [vmem:[%s0 + $0xec] sm:$0xf]
  %v75 = vld [vmem:[%s0 + $0xf0] sm:$0xf]
  %v76 = vld [vmem:[%s0 + $0xf4] sm:$0xf]
  %v77 = vld [vmem:[%s0 + $0xf8] sm:$0xf]
  %v78 = vld [vmem:[%s0 + $0xfc] sm:$0xf]
  %v79 = vld [vmem:[%s1] sm:$0xf]
  %v80 = vld [vmem:[%s1 + $0x4] sm:$0xf]
  %v81 = vld [vmem:[%s1 + $0x8] sm:$0xf]
  %v82 = vld [vmem:[%s1 + $0xc] sm:$0xf]
  %v83 = vld [vmem:[%s1 + $0x10] sm:$0xf]
  %v84 = vld [vmem:[%s1 + $0x14] sm:$0xf]
  %v85 = vld [vmem:[%s2] sm:$0x1]
  %v87 = vperm.slane %v85, 0
  %v153 = vunpack.c.l.b16 %v15
  %v154 = vunpack.c.l.b16 %v16
  %v155 = vunpack.c.l.b16 %v17
  %v156 = vunpack.c.l.b16 %v18
  %v157 = vunpack.c.l.b16 %v19
  %v158 = vunpack.c.l.b16 %v20
  %v159 = vunpack.c.l.b16 %v21
  %v160 = vunpack.c.l.b16 %v22
  %v161 = vunpack.c.l.b16 %v23
  %v162 = vunpack.c.l.b16 %v24
  %v163 = vunpack.c.l.b16 %v25
  %v164 = vunpack.c.l.b16 %v26
  %v165 = vunpack.c.l.b16 %v27
  %v166 = vunpack.c.l.b16 %v28
  %v167 = vunpack.c.l.b16 %v29
  %v168 = vunpack.c.l.b16 %v30
  %v169 = vunpack.c.l.b16 %v31
  %v170 = vunpack.c.l.b16 %v32
  %v171 = vunpack.c.l.b16 %v33
  %v172 = vunpack.c.l.b16 %v34
  %v173 = vunpack.c.l.b16 %v35
  %v174 = vunpack.c.l.b16 %v36
  %v175 = vunpack.c.l.b16 %v37
  %v176 = vunpack.c.l.b16 %v38
  %v177 = vunpack.c.l.b16 %v39
  %v178 = vunpack.c.l.b16 %v40
  %v179 = vunpack.c.l.b16 %v41
  %v180 = vunpack.c.l.b16 %v42
  %v181 = vunpack.c.l.b16 %v43
  %v182 = vunpack.c.l.b16 %v44
  %v183 = vunpack.c.l.b16 %v45
  %v184 = vunpack.c.l.b16 %v46
  %v185 = vunpack.c.l.b16 %v47
  %v186 = vunpack.c.l.b16 %v48
  %v187 = vunpack.c.l.b16 %v49
  %v188 = vunpack.c.l.b16 %v50
  %v189 = vunpack.c.l.b16 %v51
  %v190 = vunpack.c.l.b16 %v52
  %v191 = vunpack.c.l.b16 %v53
  %v192 = vunpack.c.l.b16 %v54
  %v193 = vunpack.c.l.b16 %v55
  %v194 = vunpack.c.l.b16 %v56
  %v195 = vunpack.c.l.b16 %v57
  %v196 = vunpack.c.l.b16 %v58
  %v197 = vunpack.c.l.b16 %v59
  %v198 = vunpack.c.l.b16 %v60
  %v199 = vunpack.c.l.b16 %v61
  %v200 = vunpack.c.l.b16 %v62
  %v201 = vunpack.c.l.b16 %v63
  %v202 = vunpack.c.l.b16 %v64
  %v203 = vunpack.c.l.b16 %v65
  %v204 = vunpack.c.l.b16 %v66
  %v205 = vunpack.c.l.b16 %v67
  %v206 = vunpack.c.l.b16 %v68
  %v207 = vunpack.c.l.b16 %v69
  %v208 = vunpack.c.l.b16 %v70
  %v209 = vunpack.c.l.b16 %v71
  %v210 = vunpack.c.l.b16 %v72
  %v211 = vunpack.c.l.b16 %v73
  %v212 = vunpack.c.l.b16 %v74
  %v213 = vunpack.c.l.b16 %v75
  %v214 = vunpack.c.l.b16 %v76
  %v215 = vunpack.c.l.b16 %v77
  %v216 = vunpack.c.l.b16 %v78
  %v217 = vpack.c.b16 %v154, %v153
  %v218 = vpack.c.b16 %v156, %v155
  %v219 = vpack.c.b16 %v158, %v157
  %v220 = vpack.c.b16 %v160, %v159
  %v221 = vpack.c.b16 %v162, %v161
  %v222 = vpack.c.b16 %v164, %v163
  %v223 = vpack.c.b16 %v166, %v165
  %v224 = vpack.c.b16 %v168, %v167
  %v225 = vpack.c.b16 %v170, %v169
  %v226 = vpack.c.b16 %v172, %v171
  %v227 = vpack.c.b16 %v174, %v173
  %v228 = vpack.c.b16 %v176, %v175
  %v229 = vpack.c.b16 %v178, %v177
  %v230 = vpack.c.b16 %v180, %v179
  %v231 = vpack.c.b16 %v182, %v181
  %v232 = vpack.c.b16 %v184, %v183
  %v233 = vpack.c.b16 %v186, %v185
  %v234 = vpack.c.b16 %v188, %v187
  %v235 = vpack.c.b16 %v190, %v189
  %v236 = vpack.c.b16 %v192, %v191
  %v237 = vpack.c.b16 %v194, %v193
  %v238 = vpack.c.b16 %v196, %v195
  %v239 = vpack.c.b16 %v198, %v197
  %v240 = vpack.c.b16 %v200, %v199
  %v241 = vpack.c.b16 %v202, %v201
  %v242 = vpack.c.b16 %v204, %v203
  %v243 = vpack.c.b16 %v206, %v205
  %v244 = vpack.c.b16 %v208, %v207
  %v245 = vpack.c.b16 %v210, %v209
  %v246 = vpack.c.b16 %v212, %v211
  %v247 = vpack.c.b16 %v214, %v213
  %v248 = vpack.c.b16 %v216, %v215
  %v255 = vunpack.c.l.b16 %v79
  %v256 = vunpack.c.l.b16 %v80
  %v257 = vunpack.c.l.b16 %v81
  %v258 = vunpack.c.l.b16 %v82
  %v259 = vunpack.c.l.b16 %v83
  %v260 = vunpack.c.l.b16 %v84
  %v261 = vpack.c.b16 %v256, %v255
  %v262 = vpack.c.b16 %v258, %v257
  %v263 = vpack.c.b16 %v260, %v259
  %vm267 = vcmask 392192
  %v269 = vsel %vm267, %v217, 0
  %v272 = vsel %vm267, %v218, 0
  %v275 = vsel %vm267, %v219, 0
  %v278 = vsel %vm267, %v220, 0
  %v281 = vsel %vm267, %v221, 0
  %v284 = vsel %vm267, %v222, 0
  %v287 = vsel %vm267, %v223, 0
  %v290 = vsel %vm267, %v224, 0
  %v293 = vsel %vm267, %v225, 0
  %v296 = vsel %vm267, %v226, 0
  %v299 = vsel %vm267, %v227, 0
  %v302 = vsel %vm267, %v228, 0
  %v305 = vsel %vm267, %v229, 0
  %v308 = vsel %vm267, %v230, 0
  %v311 = vsel %vm267, %v231, 0
  %v314 = vsel %vm267, %v232, 0
  %v317 = vsel %vm267, %v233, 0
  %v320 = vsel %vm267, %v234, 0
  %v323 = vsel %vm267, %v235, 0
  %v326 = vsel %vm267, %v236, 0
  %v329 = vsel %vm267, %v237, 0
  %v332 = vsel %vm267, %v238, 0
  %v335 = vsel %vm267, %v239, 0
  %v338 = vsel %vm267, %v240, 0
  %v341 = vsel %vm267, %v241, 0
  %v344 = vsel %vm267, %v242, 0
  %v347 = vsel %vm267, %v243, 0
  %v350 = vsel %vm267, %v244, 0
  %v353 = vsel %vm267, %v245, 0
  %v356 = vsel %vm267, %v246, 0
  %v359 = vsel %vm267, %v247, 0
  %v362 = vsel %vm267, %v248, 0
  %364 = vmatpush.bf16.msra.mxu0 0
  %365 = vmatpush.bf16.msra.mxu0 0
  %366 = vmatpush.bf16.msra.mxu0 0
  %367 = vmatpush.bf16.msra.mxu0 0
  %368 = vmatpush.bf16.msra.mxu0 0
  %369 = vmatpush.bf16.msra.mxu0 %v263
  %370 = vmatpush.bf16.msra.mxu0 %v262
  %371 = vmatpush.bf16.msra.mxu0 %v261
  %372 = vmatmul.bf16.gmra.mxu0 %v269
  %v373 = vpop.f32.mrf.mxu0
  %v374 = vadd.f32 %v87, %v373
  %v375 = vpop.f32.mrf.mxu0
  %v376 = vadd.f32 %v87, %v375
  %377 = vmatmul.bf16.gmra.mxu0 %v272
  %v378 = vpop.f32.mrf.mxu0
  %v379 = vadd.f32 %v87, %v378
  %v380 = vpop.f32.mrf.mxu0
  %v381 = vadd.f32 %v87, %v380
  %382 = vmatmul.bf16.gmra.mxu0 %v275
  %v383 = vpop.f32.mrf.mxu0
  %v384 = vadd.f32 %v87, %v383
  %v385 = vpop.f32.mrf.mxu0
  %v386 = vadd.f32 %v87, %v385
  %387 = vmatmul.bf16.gmra.mxu0 %v278
  %v388 = vpop.f32.mrf.mxu0
  %v389 = vadd.f32 %v87, %v388
  %v390 = vpop.f32.mrf.mxu0
  %v391 = vadd.f32 %v87, %v390
  %392 = vmatmul.bf16.gmra.mxu0 %v281
  %v393 = vpop.f32.mrf.mxu0
  %v394 = vadd.f32 %v87, %v393
  %v395 = vpop.f32.mrf.mxu0
  %v396 = vadd.f32 %v87, %v395
  %397 = vmatmul.bf16.gmra.mxu0 %v284
  %v398 = vpop.f32.mrf.mxu0
  %v399 = vadd.f32 %v87, %v398
  %v400 = vpop.f32.mrf.mxu0
  %v401 = vadd.f32 %v87, %v400
  %402 = vmatmul.bf16.gmra.mxu0 %v287
  %v403 = vpop.f32.mrf.mxu0
  %v404 = vadd.f32 %v87, %v403
  %v405 = vpop.f32.mrf.mxu0
  %v406 = vadd.f32 %v87, %v405
  %407 = vmatmul.bf16.gmra.mxu0 %v290
  %v408 = vpop.f32.mrf.mxu0
  %v409 = vadd.f32 %v87, %v408
  %v410 = vpop.f32.mrf.mxu0
  %v411 = vadd.f32 %v87, %v410
  %412 = vmatmul.bf16.gmra.mxu0 %v293
  %v413 = vpop.f32.mrf.mxu0
  %v414 = vadd.f32 %v87, %v413
  %v415 = vpop.f32.mrf.mxu0
  %v416 = vadd.f32 %v87, %v415
  %417 = vmatmul.bf16.gmra.mxu0 %v296
  %v418 = vpop.f32.mrf.mxu0
  %v419 = vadd.f32 %v87, %v418
  %v420 = vpop.f32.mrf.mxu0
  %v421 = vadd.f32 %v87, %v420
  %422 = vmatmul.bf16.gmra.mxu0 %v299
  %v423 = vpop.f32.mrf.mxu0
  %v424 = vadd.f32 %v87, %v423
  %v425 = vpop.f32.mrf.mxu0
  %v426 = vadd.f32 %v87, %v425
  %427 = vmatmul.bf16.gmra.mxu0 %v302
  %v428 = vpop.f32.mrf.mxu0
  %v429 = vadd.f32 %v87, %v428
  %v430 = vpop.f32.mrf.mxu0
  %v431 = vadd.f32 %v87, %v430
  %432 = vmatmul.bf16.gmra.mxu0 %v305
  %v433 = vpop.f32.mrf.mxu0
  %v434 = vadd.f32 %v87, %v433
  %v435 = vpop.f32.mrf.mxu0
  %v436 = vadd.f32 %v87, %v435
  %437 = vmatmul.bf16.gmra.mxu0 %v308
  %v438 = vpop.f32.mrf.mxu0
  %v439 = vadd.f32 %v87, %v438
  %v440 = vpop.f32.mrf.mxu0
  %v441 = vadd.f32 %v87, %v440
  %442 = vmatmul.bf16.gmra.mxu0 %v311
  %v443 = vpop.f32.mrf.mxu0
  %v444 = vadd.f32 %v87, %v443
  %v445 = vpop.f32.mrf.mxu0
  %v446 = vadd.f32 %v87, %v445
  %447 = vmatmul.bf16.gmra.mxu0 %v314
  %v448 = vpop.f32.mrf.mxu0
  %v449 = vadd.f32 %v87, %v448
  %v450 = vpop.f32.mrf.mxu0
  %v451 = vadd.f32 %v87, %v450
  %452 = vmatmul.bf16.gmra.mxu0 %v317
  %v453 = vpop.f32.mrf.mxu0
  %v454 = vadd.f32 %v87, %v453
  %v455 = vpop.f32.mrf.mxu0
  %v456 = vadd.f32 %v87, %v455
  %457 = vmatmul.bf16.gmra.mxu0 %v320
  %v458 = vpop.f32.mrf.mxu0
  %v459 = vadd.f32 %v87, %v458
  %v460 = vpop.f32.mrf.mxu0
  %v461 = vadd.f32 %v87, %v460
  %462 = vmatmul.bf16.gmra.mxu0 %v323
  %v463 = vpop.f32.mrf.mxu0
  %v464 = vadd.f32 %v87, %v463
  %v465 = vpop.f32.mrf.mxu0
  %v466 = vadd.f32 %v87, %v465
  %467 = vmatmul.bf16.gmra.mxu0 %v326
  %v468 = vpop.f32.mrf.mxu0
  %v469 = vadd.f32 %v87, %v468
  %v470 = vpop.f32.mrf.mxu0
  %v471 = vadd.f32 %v87, %v470
  %472 = vmatmul.bf16.gmra.mxu0 %v329
  %v473 = vpop.f32.mrf.mxu0
  %v474 = vadd.f32 %v87, %v473
  %v475 = vpop.f32.mrf.mxu0
  %v476 = vadd.f32 %v87, %v475
  %477 = vmatmul.bf16.gmra.mxu0 %v332
  %v478 = vpop.f32.mrf.mxu0
  %v479 = vadd.f32 %v87, %v478
  %v480 = vpop.f32.mrf.mxu0
  %v481 = vadd.f32 %v87, %v480
  %482 = vmatmul.bf16.gmra.mxu0 %v335
  %v483 = vpop.f32.mrf.mxu0
  %v484 = vadd.f32 %v87, %v483
  %v485 = vpop.f32.mrf.mxu0
  %v486 = vadd.f32 %v87, %v485
  %487 = vmatmul.bf16.gmra.mxu0 %v338
  %v488 = vpop.f32.mrf.mxu0
  %v489 = vadd.f32 %v87, %v488
  %v490 = vpop.f32.mrf.mxu0
  %v491 = vadd.f32 %v87, %v490
  %492 = vmatmul.bf16.gmra.mxu0 %v341
  %v493 = vpop.f32.mrf.mxu0
  %v494 = vadd.f32 %v87, %v493
  %v495 = vpop.f32.mrf.mxu0
  %v496 = vadd.f32 %v87, %v495
  %497 = vmatmul.bf16.gmra.mxu0 %v344
  %v498 = vpop.f32.mrf.mxu0
  %v499 = vadd.f32 %v87, %v498
  %v500 = vpop.f32.mrf.mxu0
  %v501 = vadd.f32 %v87, %v500
  %502 = vmatmul.bf16.gmra.mxu0 %v347
  %v503 = vpop.f32.mrf.mxu0
  %v504 = vadd.f32 %v87, %v503
  %v505 = vpop.f32.mrf.mxu0
  %v506 = vadd.f32 %v87, %v505
  %507 = vmatmul.bf16.gmra.mxu0 %v350
  %v508 = vpop.f32.mrf.mxu0
  %v509 = vadd.f32 %v87, %v508
  %v510 = vpop.f32.mrf.mxu0
  %v511 = vadd.f32 %v87, %v510
  %512 = vmatmul.bf16.gmra.mxu0 %v353
  %v513 = vpop.f32.mrf.mxu0
  %v514 = vadd.f32 %v87, %v513
  %v515 = vpop.f32.mrf.mxu0
  %v516 = vadd.f32 %v87, %v515
  %517 = vmatmul.bf16.gmra.mxu0 %v356
  %v518 = vpop.f32.mrf.mxu0
  %v519 = vadd.f32 %v87, %v518
  %v520 = vpop.f32.mrf.mxu0
  %v521 = vadd.f32 %v87, %v520
  %522 = vmatmul.bf16.gmra.mxu0 %v359
  %v523 = vpop.f32.mrf.mxu0
  %v524 = vadd.f32 %v87, %v523
  %v525 = vpop.f32.mrf.mxu0
  %v526 = vadd.f32 %v87, %v525
  %527 = vmatmul.bf16.gmra.mxu0 %v362
  %v528 = vpop.f32.mrf.mxu0
  %v529 = vadd.f32 %v87, %v528
  %v530 = vpop.f32.mrf.mxu0
  %v531 = vadd.f32 %v87, %v530
  %532 = vdwg.mxu0
  %vm533 = vcmp.ge.f32.partialorder %v374, 0.0
  %vm534 = vcmp.ge.f32.partialorder %v376, 0.0
  %vm535 = vcmp.ge.f32.partialorder %v379, 0.0
  %vm536 = vcmp.ge.f32.partialorder %v381, 0.0
  %vm537 = vcmp.ge.f32.partialorder %v384, 0.0
  %vm538 = vcmp.ge.f32.partialorder %v386, 0.0
  %vm539 = vcmp.ge.f32.partialorder %v389, 0.0
  %vm540 = vcmp.ge.f32.partialorder %v391, 0.0
  %vm541 = vcmp.ge.f32.partialorder %v394, 0.0
  %vm542 = vcmp.ge.f32.partialorder %v396, 0.0
  %vm543 = vcmp.ge.f32.partialorder %v399, 0.0
  %vm544 = vcmp.ge.f32.partialorder %v401, 0.0
  %vm545 = vcmp.ge.f32.partialorder %v404, 0.0
  %vm546 = vcmp.ge.f32.partialorder %v406, 0.0
  %vm547 = vcmp.ge.f32.partialorder %v409, 0.0
  %vm548 = vcmp.ge.f32.partialorder %v411, 0.0
  %vm549 = vcmp.ge.f32.partialorder %v414, 0.0
  %vm550 = vcmp.ge.f32.partialorder %v416, 0.0
  %vm551 = vcmp.ge.f32.partialorder %v419, 0.0
  %vm552 = vcmp.ge.f32.partialorder %v421, 0.0
  %vm553 = vcmp.ge.f32.partialorder %v424, 0.0
  %vm554 = vcmp.ge.f32.partialorder %v426, 0.0
  %vm555 = vcmp.ge.f32.partialorder %v429, 0.0
  %vm556 = vcmp.ge.f32.partialorder %v431, 0.0
  %vm557 = vcmp.ge.f32.partialorder %v434, 0.0
  %vm558 = vcmp.ge.f32.partialorder %v436, 0.0
  %vm559 = vcmp.ge.f32.partialorder %v439, 0.0
  %vm560 = vcmp.ge.f32.partialorder %v441, 0.0
  %vm561 = vcmp.ge.f32.partialorder %v444, 0.0
  %vm562 = vcmp.ge.f32.partialorder %v446, 0.0
  %vm563 = vcmp.ge.f32.partialorder %v449, 0.0
  %vm564 = vcmp.ge.f32.partialorder %v451, 0.0
  %vm565 = vcmp.ge.f32.partialorder %v454, 0.0
  %vm566 = vcmp.ge.f32.partialorder %v456, 0.0
  %vm567 = vcmp.ge.f32.partialorder %v459, 0.0
  %vm568 = vcmp.ge.f32.partialorder %v461, 0.0
  %vm569 = vcmp.ge.f32.partialorder %v464, 0.0
  %vm570 = vcmp.ge.f32.partialorder %v466, 0.0
  %vm571 = vcmp.ge.f32.partialorder %v469, 0.0
  %vm572 = vcmp.ge.f32.partialorder %v471, 0.0
  %vm573 = vcmp.ge.f32.partialorder %v474, 0.0
  %vm574 = vcmp.ge.f32.partialorder %v476, 0.0
  %vm575 = vcmp.ge.f32.partialorder %v479, 0.0
  %vm576 = vcmp.ge.f32.partialorder %v481, 0.0
  %vm577 = vcmp.ge.f32.partialorder %v484, 0.0
  %vm578 = vcmp.ge.f32.partialorder %v486, 0.0
  %vm579 = vcmp.ge.f32.partialorder %v489, 0.0
  %vm580 = vcmp.ge.f32.partialorder %v491, 0.0
  %vm581 = vcmp.ge.f32.partialorder %v494, 0.0
  %vm582 = vcmp.ge.f32.partialorder %v496, 0.0
  %vm583 = vcmp.ge.f32.partialorder %v499, 0.0
  %vm584 = vcmp.ge.f32.partialorder %v501, 0.0
  %vm585 = vcmp.ge.f32.partialorder %v504, 0.0
  %vm586 = vcmp.ge.f32.partialorder %v506, 0.0
  %vm587 = vcmp.ge.f32.partialorder %v509, 0.0
  %vm588 = vcmp.ge.f32.partialorder %v511, 0.0
  %vm589 = vcmp.ge.f32.partialorder %v514, 0.0
  %vm590 = vcmp.ge.f32.partialorder %v516, 0.0
  %vm591 = vcmp.ge.f32.partialorder %v519, 0.0
  %vm592 = vcmp.ge.f32.partialorder %v521, 0.0
  %vm593 = vcmp.ge.f32.partialorder %v524, 0.0
  %vm594 = vcmp.ge.f32.partialorder %v526, 0.0
  %vm595 = vcmp.ge.f32.partialorder %v529, 0.0
  %vm596 = vcmp.ge.f32.partialorder %v531, 0.0
  %v597 = vmul.f32 %v374, 0.2
  %v598 = vmul.f32 %v376, 0.2
  %v599 = vmul.f32 %v379, 0.2
  %v600 = vmul.f32 %v381, 0.2
  %v601 = vmul.f32 %v384, 0.2
  %v602 = vmul.f32 %v386, 0.2
  %v603 = vmul.f32 %v389, 0.2
  %v604 = vmul.f32 %v391, 0.2
  %v605 = vmul.f32 %v394, 0.2
  %v606 = vmul.f32 %v396, 0.2
  %v607 = vmul.f32 %v399, 0.2
  %v608 = vmul.f32 %v401, 0.2
  %v609 = vmul.f32 %v404, 0.2
  %v610 = vmul.f32 %v406, 0.2
  %v611 = vmul.f32 %v409, 0.2
  %v612 = vmul.f32 %v411, 0.2
  %v613 = vmul.f32 %v414, 0.2
  %v614 = vmul.f32 %v416, 0.2
  %v615 = vmul.f32 %v419, 0.2
  %v616 = vmul.f32 %v421, 0.2
  %v617 = vmul.f32 %v424, 0.2
  %v618 = vmul.f32 %v426, 0.2
  %v619 = vmul.f32 %v429, 0.2
  %v620 = vmul.f32 %v431, 0.2
  %v621 = vmul.f32 %v434, 0.2
  %v622 = vmul.f32 %v436, 0.2
  %v623 = vmul.f32 %v439, 0.2
  %v624 = vmul.f32 %v441, 0.2
  %v625 = vmul.f32 %v444, 0.2
  %v626 = vmul.f32 %v446, 0.2
  %v627 = vmul.f32 %v449, 0.2
  %v628 = vmul.f32 %v451, 0.2
  %v629 = vmul.f32 %v454, 0.2
  %v630 = vmul.f32 %v456, 0.2
  %v631 = vmul.f32 %v459, 0.2
  %v632 = vmul.f32 %v461, 0.2
  %v633 = vmul.f32 %v464, 0.2
  %v634 = vmul.f32 %v466, 0.2
  %v635 = vmul.f32 %v469, 0.2
  %v636 = vmul.f32 %v471, 0.2
  %v637 = vmul.f32 %v474, 0.2
  %v638 = vmul.f32 %v476, 0.2
  %v639 = vmul.f32 %v479, 0.2
  %v640 = vmul.f32 %v481, 0.2
  %v641 = vmul.f32 %v484, 0.2
  %v642 = vmul.f32 %v486, 0.2
  %v643 = vmul.f32 %v489, 0.2
  %v644 = vmul.f32 %v491, 0.2
  %v645 = vmul.f32 %v494, 0.2
  %v646 = vmul.f32 %v496, 0.2
  %v647 = vmul.f32 %v499, 0.2
  %v648 = vmul.f32 %v501, 0.2
  %v649 = vmul.f32 %v504, 0.2
  %v650 = vmul.f32 %v506, 0.2
  %v651 = vmul.f32 %v509, 0.2
  %v652 = vmul.f32 %v511, 0.2
  %v653 = vmul.f32 %v514, 0.2
  %v654 = vmul.f32 %v516, 0.2
  %v655 = vmul.f32 %v519, 0.2
  %v656 = vmul.f32 %v521, 0.2
  %v657 = vmul.f32 %v524, 0.2
  %v658 = vmul.f32 %v526, 0.2
  %v659 = vmul.f32 %v529, 0.2
  %v660 = vmul.f32 %v531, 0.2
  %v661 = vsel %vm533, %v374, %v597
  %v662 = vsel %vm534, %v376, %v598
  %v663 = vsel %vm535, %v379, %v599
  %v664 = vsel %vm536, %v381, %v600
  %v665 = vsel %vm537, %v384, %v601
  %v666 = vsel %vm538, %v386, %v602
  %v667 = vsel %vm539, %v389, %v603
  %v668 = vsel %vm540, %v391, %v604
  %v669 = vsel %vm541, %v394, %v605
  %v670 = vsel %vm542, %v396, %v606
  %v671 = vsel %vm543, %v399, %v607
  %v672 = vsel %vm544, %v401, %v608
  %v673 = vsel %vm545, %v404, %v609
  %v674 = vsel %vm546, %v406, %v610
  %v675 = vsel %vm547, %v409, %v611
  %v676 = vsel %vm548, %v411, %v612
  %v677 = vsel %vm549, %v414, %v613
  %v678 = vsel %vm550, %v416, %v614
  %v679 = vsel %vm551, %v419, %v615
  %v680 = vsel %vm552, %v421, %v616
  %v681 = vsel %vm553, %v424, %v617
  %v682 = vsel %vm554, %v426, %v618
  %v683 = vsel %vm555, %v429, %v619
  %v684 = vsel %vm556, %v431, %v620
  %v685 = vsel %vm557, %v434, %v621
  %v686 = vsel %vm558, %v436, %v622
  %v687 = vsel %vm559, %v439, %v623
  %v688 = vsel %vm560, %v441, %v624
  %v689 = vsel %vm561, %v444, %v625
  %v690 = vsel %vm562, %v446, %v626
  %v691 = vsel %vm563, %v449, %v627
  %v692 = vsel %vm564, %v451, %v628
  %v693 = vsel %vm565, %v454, %v629
  %v694 = vsel %vm566, %v456, %v630
  %v695 = vsel %vm567, %v459, %v631
  %v696 = vsel %vm568, %v461, %v632
  %v697 = vsel %vm569, %v464, %v633
  %v698 = vsel %vm570, %v466, %v634
  %v699 = vsel %vm571, %v469, %v635
  %v700 = vsel %vm572, %v471, %v636
  %v701 = vsel %vm573, %v474, %v637
  %v702 = vsel %vm574, %v476, %v638
  %v703 = vsel %vm575, %v479, %v639
  %v704 = vsel %vm576, %v481, %v640
  %v705 = vsel %vm577, %v484, %v641
  %v706 = vsel %vm578, %v486, %v642
  %v707 = vsel %vm579, %v489, %v643
  %v708 = vsel %vm580, %v491, %v644
  %v709 = vsel %vm581, %v494, %v645
  %v710 = vsel %vm582, %v496, %v646
  %v711 = vsel %vm583, %v499, %v647
  %v712 = vsel %vm584, %v501, %v648
  %v713 = vsel %vm585, %v504, %v649
  %v714 = vsel %vm586, %v506, %v650
  %v715 = vsel %vm587, %v509, %v651
  %v716 = vsel %vm588, %v511, %v652
  %v717 = vsel %vm589, %v514, %v653
  %v718 = vsel %vm590, %v516, %v654
  %v719 = vsel %vm591, %v519, %v655
  %v720 = vsel %vm592, %v521, %v656
  %v721 = vsel %vm593, %v524, %v657
  %v722 = vsel %vm594, %v526, %v658
  %v723 = vsel %vm595, %v529, %v659
  %v724 = vsel %vm596, %v531, %v660
  %v725 = vpack.c.bf16 %v661, %v661
  %v726 = vpack.c.bf16 %v662, %v662
  %v727 = vpack.c.bf16 %v663, %v663
  %v728 = vpack.c.bf16 %v664, %v664
  %v729 = vpack.c.bf16 %v665, %v665
  %v730 = vpack.c.bf16 %v666, %v666
  %v731 = vpack.c.bf16 %v667, %v667
  %v732 = vpack.c.bf16 %v668, %v668
  %v733 = vpack.c.bf16 %v669, %v669
  %v734 = vpack.c.bf16 %v670, %v670
  %v735 = vpack.c.bf16 %v671, %v671
  %v736 = vpack.c.bf16 %v672, %v672
  %v737 = vpack.c.bf16 %v673, %v673
  %v738 = vpack.c.bf16 %v674, %v674
  %v739 = vpack.c.bf16 %v675, %v675
  %v740 = vpack.c.bf16 %v676, %v676
  %v741 = vpack.c.bf16 %v677, %v677
  %v742 = vpack.c.bf16 %v678, %v678
  %v743 = vpack.c.bf16 %v679, %v679
  %v744 = vpack.c.bf16 %v680, %v680
  %v745 = vpack.c.bf16 %v681, %v681
  %v746 = vpack.c.bf16 %v682, %v682
  %v747 = vpack.c.bf16 %v683, %v683
  %v748 = vpack.c.bf16 %v684, %v684
  %v749 = vpack.c.bf16 %v685, %v685
  %v750 = vpack.c.bf16 %v686, %v686
  %v751 = vpack.c.bf16 %v687, %v687
  %v752 = vpack.c.bf16 %v688, %v688
  %v753 = vpack.c.bf16 %v689, %v689
  %v754 = vpack.c.bf16 %v690, %v690
  %v755 = vpack.c.bf16 %v691, %v691
  %v756 = vpack.c.bf16 %v692, %v692
  %v757 = vpack.c.bf16 %v693, %v693
  %v758 = vpack.c.bf16 %v694, %v694
  %v759 = vpack.c.bf16 %v695, %v695
  %v760 = vpack.c.bf16 %v696, %v696
  %v761 = vpack.c.bf16 %v697, %v697
  %v762 = vpack.c.bf16 %v698, %v698
  %v763 = vpack.c.bf16 %v699, %v699
  %v764 = vpack.c.bf16 %v700, %v700
  %v765 = vpack.c.bf16 %v701, %v701
  %v766 = vpack.c.bf16 %v702, %v702
  %v767 = vpack.c.bf16 %v703, %v703
  %v768 = vpack.c.bf16 %v704, %v704
  %v769 = vpack.c.bf16 %v705, %v705
  %v770 = vpack.c.bf16 %v706, %v706
  %v771 = vpack.c.bf16 %v707, %v707
  %v772 = vpack.c.bf16 %v708, %v708
  %v773 = vpack.c.bf16 %v709, %v709
  %v774 = vpack.c.bf16 %v710, %v710
  %v775 = vpack.c.bf16 %v711, %v711
  %v776 = vpack.c.bf16 %v712, %v712
  %v777 = vpack.c.bf16 %v713, %v713
  %v778 = vpack.c.bf16 %v714, %v714
  %v779 = vpack.c.bf16 %v715, %v715
  %v780 = vpack.c.bf16 %v716, %v716
  %v781 = vpack.c.bf16 %v717, %v717
  %v782 = vpack.c.bf16 %v718, %v718
  %v783 = vpack.c.bf16 %v719, %v719
  %v784 = vpack.c.bf16 %v720, %v720
  %v785 = vpack.c.bf16 %v721, %v721
  %v786 = vpack.c.bf16 %v722, %v722
  %v787 = vpack.c.bf16 %v723, %v723
  %v788 = vpack.c.bf16 %v724, %v724
  %789 = vst [vmem:[%s3] sm:$0xf] %v725
  %790 = vst [vmem:[%s3 + $0x4] sm:$0xf] %v726
  %791 = vst [vmem:[%s3 + $0x8] sm:$0xf] %v727
  %792 = vst [vmem:[%s3 + $0xc] sm:$0xf] %v728
  %793 = vst [vmem:[%s3 + $0x10] sm:$0xf] %v729
  %794 = vst [vmem:[%s3 + $0x14] sm:$0xf] %v730
  %795 = vst [vmem:[%s3 + $0x18] sm:$0xf] %v731
  %796 = vst [vmem:[%s3 + $0x1c] sm:$0xf] %v732
  %797 = vst [vmem:[%s3 + $0x20] sm:$0xf] %v733
  %798 = vst [vmem:[%s3 + $0x24] sm:$0xf] %v734
  %799 = vst [vmem:[%s3 + $0x28] sm:$0xf] %v735
  %800 = vst [vmem:[%s3 + $0x2c] sm:$0xf] %v736
  %801 = vst [vmem:[%s3 + $0x30] sm:$0xf] %v737
  %802 = vst [vmem:[%s3 + $0x34] sm:$0xf] %v738
  %803 = vst [vmem:[%s3 + $0x38] sm:$0xf] %v739
  %804 = vst [vmem:[%s3 + $0x3c] sm:$0xf] %v740
  %805 = vst [vmem:[%s3 + $0x40] sm:$0xf] %v741
  %806 = vst [vmem:[%s3 + $0x44] sm:$0xf] %v742
  %807 = vst [vmem:[%s3 + $0x48] sm:$0xf] %v743
  %808 = vst [vmem:[%s3 + $0x4c] sm:$0xf] %v744
  %809 = vst [vmem:[%s3 + $0x50] sm:$0xf] %v745
  %810 = vst [vmem:[%s3 + $0x54] sm:$0xf] %v746
  %811 = vst [vmem:[%s3 + $0x58] sm:$0xf] %v747
  %812 = vst [vmem:[%s3 + $0x5c] sm:$0xf] %v748
  %813 = vst [vmem:[%s3 + $0x60] sm:$0xf] %v749
  %814 = vst [vmem:[%s3 + $0x64] sm:$0xf] %v750
  %815 = vst [vmem:[%s3 + $0x68] sm:$0xf] %v751
  %816 = vst [vmem:[%s3 + $0x6c] sm:$0xf] %v752
  %817 = vst [vmem:[%s3 + $0x70] sm:$0xf] %v753
  %818 = vst [vmem:[%s3 + $0x74] sm:$0xf] %v754
  %819 = vst [vmem:[%s3 + $0x78] sm:$0xf] %v755
  %820 = vst [vmem:[%s3 + $0x7c] sm:$0xf] %v756
  %821 = vst [vmem:[%s3 + $0x80] sm:$0xf] %v757
  %822 = vst [vmem:[%s3 + $0x84] sm:$0xf] %v758
  %823 = vst [vmem:[%s3 + $0x88] sm:$0xf] %v759
  %824 = vst [vmem:[%s3 + $0x8c] sm:$0xf] %v760
  %825 = vst [vmem:[%s3 + $0x90] sm:$0xf] %v761
  %826 = vst [vmem:[%s3 + $0x94] sm:$0xf] %v762
  %827 = vst [vmem:[%s3 + $0x98] sm:$0xf] %v763
  %828 = vst [vmem:[%s3 + $0x9c] sm:$0xf] %v764
  %829 = vst [vmem:[%s3 + $0xa0] sm:$0xf] %v765
  %830 = vst [vmem:[%s3 + $0xa4] sm:$0xf] %v766
  %831 = vst [vmem:[%s3 + $0xa8] sm:$0xf] %v767
  %832 = vst [vmem:[%s3 + $0xac] sm:$0xf] %v768
  %833 = vst [vmem:[%s3 + $0xb0] sm:$0xf] %v769
  %834 = vst [vmem:[%s3 + $0xb4] sm:$0xf] %v770
  %835 = vst [vmem:[%s3 + $0xb8] sm:$0xf] %v771
  %836 = vst [vmem:[%s3 + $0xbc] sm:$0xf] %v772
  %837 = vst [vmem:[%s3 + $0xc0] sm:$0xf] %v773
  %838 = vst [vmem:[%s3 + $0xc4] sm:$0xf] %v774
  %839 = vst [vmem:[%s3 + $0xc8] sm:$0xf] %v775
  %840 = vst [vmem:[%s3 + $0xcc] sm:$0xf] %v776
  %841 = vst [vmem:[%s3 + $0xd0] sm:$0xf] %v777
  %842 = vst [vmem:[%s3 + $0xd4] sm:$0xf] %v778
  %843 = vst [vmem:[%s3 + $0xd8] sm:$0xf] %v779
  %844 = vst [vmem:[%s3 + $0xdc] sm:$0xf] %v780
  %845 = vst [vmem:[%s3 + $0xe0] sm:$0xf] %v781
  %846 = vst [vmem:[%s3 + $0xe4] sm:$0xf] %v782
  %847 = vst [vmem:[%s3 + $0xe8] sm:$0xf] %v783
  %848 = vst [vmem:[%s3 + $0xec] sm:$0xf] %v784
  %849 = vst [vmem:[%s3 + $0xf0] sm:$0xf] %v785
  %850 = vst [vmem:[%s3 + $0xf4] sm:$0xf] %v786
  %851 = vst [vmem:[%s3 + $0xf8] sm:$0xf] %v787
  %852 = vst [vmem:[%s3 + $0xfc] sm:$0xf] %v788
  // Predicated region
  $region14: #{discriminator_forward.4} parent=0 // pred_check
    _
  $region15: #{discriminator_forward.4} parent=0 // pred_check_branch
    %854 = sbr.rel (0) target = $region17
  $region16: #{discriminator_forward.4} parent=0 // pred_region
    _
  $region17: #{discriminator_forward.4} parent=0 // pred_fallthru
    _
  // Predicated region
  $region18: #{discriminator_forward.4} parent=0 // pred_check
    _
  $region19: #{discriminator_forward.4} parent=0 // pred_check_branch
    %856 = sbr.rel (0) target = $region21
  $region20: #{discriminator_forward.4} parent=0 // pred_region
    _
  $region21: #{discriminator_forward.4} parent=0 // pred_fallthru
    _

// kernel: discriminator_forward.5
$region0: #{discriminator_forward.5}
  #allocation0 [shape = 'u32[]', space=smem, size = 0x4, offset = 0x4, fixed_abs, tag = 'smem constant byte address 0x4 - core index']
  #allocation1 [shape = 'u32[72,128]{1,0:T(1,128)}', space=vmem, size = 0x9000, scoped, tag = 'internal scratch']
  %s0 = inlined_call_operand.vmem [shape: bf16[128,128], index: 0, kind: input, shape index: {}]
  %s1 = inlined_call_operand.vmem [shape: bf16[128,128], index: 1, kind: input, shape index: {}]
  %s2 = inlined_call_operand.vmem [shape: f32[1,128], index: 2, kind: input, shape index: {}]
  %s3 = inlined_call_operand.vmem [shape: f32[1,128], index: 3, kind: input, shape index: {}]
  %s4 = inlined_call_operand.vmem [shape: f32[1,128], index: 4, kind: input, shape index: {}]
  %s5 = inlined_call_operand.vmem [shape: bf16[128,128], index: 5, kind: output, shape index: {}]
  %s6 = sld [smem:[#allocation0]]
  $region30: #{discriminator_forward.5} parent=0
    _
  %s8 = ssub.s32 1, %s6
  %s9 = scalar_select 0, %s8, %s6
  // Predicated region
  $region2: #{discriminator_forward.5} parent=0 // pred_check
    _
  $region3: #{discriminator_forward.5} parent=0 // pred_check_branch
    %11 = sbr.rel (0) target = $region5
  $region4: #{discriminator_forward.5} parent=0 // pred_region
    _
  $region5: #{discriminator_forward.5} parent=0 // pred_fallthru
    _
  // Predicated region
  $region6: #{discriminator_forward.5} parent=0 // pred_check
    _
  $region7: #{discriminator_forward.5} parent=0 // pred_check_branch
    %13 = sbr.rel (0) target = $region9
  $region8: #{discriminator_forward.5} parent=0 // pred_region
    _
  $region9: #{discriminator_forward.5} parent=0 // pred_fallthru
    _
  // Predicated region
  $region10: #{discriminator_forward.5} parent=0 // pred_check
    _
  $region11: #{discriminator_forward.5} parent=0 // pred_check_branch
    %15 = sbr.rel (0) target = $region13
  $region12: #{discriminator_forward.5} parent=0 // pred_region
    _
  $region13: #{discriminator_forward.5} parent=0 // pred_fallthru
    _
  // Predicated region
  $region14: #{discriminator_forward.5} parent=0 // pred_check
    _
  $region15: #{discriminator_forward.5} parent=0 // pred_check_branch
    %17 = sbr.rel (0) target = $region17
  $region16: #{discriminator_forward.5} parent=0 // pred_region
    _
  $region17: #{discriminator_forward.5} parent=0 // pred_fallthru
    _
  // Predicated region
  $region18: #{discriminator_forward.5} parent=0 // pred_check
    _
  $region19: #{discriminator_forward.5} parent=0 // pred_check_branch
    %19 = sbr.rel (0) target = $region21
  $region20: #{discriminator_forward.5} parent=0 // pred_region
    _
  $region21: #{discriminator_forward.5} parent=0 // pred_fallthru
    _
  %v20 = vld [vmem:[%s0] sm:$0xf]
  %v21 = vld [vmem:[%s0 + $0x4] sm:$0xf]
  %v22 = vld [vmem:[%s0 + $0x8] sm:$0xf]
  %v23 = vld [vmem:[%s0 + $0xc] sm:$0xf]
  %v24 = vld [vmem:[%s0 + $0x10] sm:$0xf]
  %v25 = vld [vmem:[%s0 + $0x14] sm:$0xf]
  %v26 = vld [vmem:[%s0 + $0x18] sm:$0xf]
  %v27 = vld [vmem:[%s0 + $0x1c] sm:$0xf]
  %v28 = vld [vmem:[%s0 + $0x20] sm:$0xf]
  %v29 = vld [vmem:[%s0 + $0x24] sm:$0xf]
  %v30 = vld [vmem:[%s0 + $0x28] sm:$0xf]
  %v31 = vld [vmem:[%s0 + $0x2c] sm:$0xf]
  %v32 = vld [vmem:[%s0 + $0x30] sm:$0xf]
  %v33 = vld [vmem:[%s0 + $0x34] sm:$0xf]
  %v34 = vld [vmem:[%s0 + $0x38] sm:$0xf]
  %v35 = vld [vmem:[%s0 + $0x3c] sm:$0xf]
  %v36 = vld [vmem:[%s1] sm:$0xf]
  %v37 = vld [vmem:[%s1 + $0x4] sm:$0xf]
  %v38 = vld [vmem:[%s1 + $0x8] sm:$0xf]
  %v39 = vld [vmem:[%s1 + $0xc] sm:$0xf]
  %v40 = vld [vmem:[%s1 + $0x10] sm:$0xf]
  %v41 = vld [vmem:[%s1 + $0x14] sm:$0xf]
  %v42 = vld [vmem:[%s1 + $0x18] sm:$0xf]
  %v43 = vld [vmem:[%s1 + $0x1c] sm:$0xf]
  %v44 = vld [vmem:[%s1 + $0x20] sm:$0xf]
  %v45 = vld [vmem:[%s1 + $0x24] sm:$0xf]
  %v46 = vld [vmem:[%s1 + $0x28] sm:$0xf]
  %v47 = vld [vmem:[%s1 + $0x2c] sm:$0xf]
  %v48 = vld [vmem:[%s1 + $0x30] sm:$0xf]
  %v49 = vld [vmem:[%s1 + $0x34] sm:$0xf]
  %v50 = vld [vmem:[%s1 + $0x38] sm:$0xf]
  %v51 = vld [vmem:[%s1 + $0x3c] sm:$0xf]
  %v52 = vld [vmem:[%s2] sm:$0x1]
  %v54 = vperm.slane %v52, 0
  %v72 = vunpack.c.l.b16 %v20
  %v73 = vunpack.c.l.b16 %v21
  %v74 = vunpack.c.l.b16 %v22
  %v75 = vunpack.c.l.b16 %v23
  %v76 = vunpack.c.l.b16 %v24
  %v77 = vunpack.c.l.b16 %v25
  %v78 = vunpack.c.l.b16 %v26
  %v79 = vunpack.c.l.b16 %v27
  %v80 = vunpack.c.l.b16 %v28
  %v81 = vunpack.c.l.b16 %v29
  %v82 = vunpack.c.l.b16 %v30
  %v83 = vunpack.c.l.b16 %v31
  %v84 = vunpack.c.l.b16 %v32
  %v85 = vunpack.c.l.b16 %v33
  %v86 = vunpack.c.l.b16 %v34
  %v87 = vunpack.c.l.b16 %v35
  %v88 = vpack.c.b16 %v73, %v72
  %v89 = vpack.c.b16 %v75, %v74
  %v90 = vpack.c.b16 %v77, %v76
  %v91 = vpack.c.b16 %v79, %v78
  %v92 = vpack.c.b16 %v81, %v80
  %v93 = vpack.c.b16 %v83, %v82
  %v94 = vpack.c.b16 %v85, %v84
  %v95 = vpack.c.b16 %v87, %v86
  %v120 = vunpack.c.l.b16 %v36
  %v121 = vunpack.c.l.b16 %v37
  %v122 = vunpack.c.l.b16 %v38
  %v123 = vunpack.c.l.b16 %v39
  %v124 = vunpack.c.l.b16 %v40
  %v125 = vunpack.c.l.b16 %v41
  %v126 = vunpack.c.l.b16 %v42
  %v127 = vunpack.c.l.b16 %v43
  %v128 = vunpack.c.l.b16 %v44
  %v129 = vunpack.c.l.b16 %v45
  %v130 = vunpack.c.l.b16 %v46
  %v131 = vunpack.c.l.b16 %v47
  %v132 = vunpack.c.l.b16 %v48
  %v133 = vunpack.c.l.b16 %v49
  %v134 = vunpack.c.l.b16 %v50
  %v135 = vunpack.c.l.b16 %v51
  %v136 = vpack.c.b16 %v121, %v120
  %v137 = vpack.c.b16 %v123, %v122
  %v138 = vpack.c.b16 %v125, %v124
  %v139 = vpack.c.b16 %v127, %v126
  %v140 = vpack.c.b16 %v129, %v128
  %v141 = vpack.c.b16 %v131, %v130
  %v142 = vpack.c.b16 %v133, %v132
  %v143 = vpack.c.b16 %v135, %v134
  %152 = vmatpush.bf16.msra.mxu0 %v143
  %153 = vmatpush.bf16.msra.mxu0 %v142
  %154 = vmatpush.bf16.msra.mxu0 %v141
  %155 = vmatpush.bf16.msra.mxu0 %v140
  %156 = vmatpush.bf16.msra.mxu0 %v139
  %157 = vmatpush.bf16.msra.mxu0 %v138
  %158 = vmatpush.bf16.msra.mxu0 %v137
  %159 = vmatpush.bf16.msra.mxu0 %v136
  %160 = vmatmul.bf16.gmra.mxu0 %v88
  %v161 = vpop.f32.mrf.mxu0
  %v162 = vadd.f32 %v54, %v161
  %v163 = vpop.f32.mrf.mxu0
  %v164 = vadd.f32 %v54, %v163
  %165 = vmatmul.bf16.gmra.mxu0 %v89
  %v166 = vpop.f32.mrf.mxu0
  %v167 = vadd.f32 %v54, %v166
  %v168 = vpop.f32.mrf.mxu0
  %v169 = vadd.f32 %v54, %v168
  %170 = vmatmul.bf16.gmra.mxu0 %v90
  %v171 = vpop.f32.mrf.mxu0
  %v172 = vadd.f32 %v54, %v171
  %v173 = vpop.f32.mrf.mxu0
  %v174 = vadd.f32 %v54, %v173
  %175 = vmatmul.bf16.gmra.mxu0 %v91
  %v176 = vpop.f32.mrf.mxu0
  %v177 = vadd.f32 %v54, %v176
  %v178 = vpop.f32.mrf.mxu0
  %v179 = vadd.f32 %v54, %v178
  %180 = vmatmul.bf16.gmra.mxu0 %v92
  %v181 = vpop.f32.mrf.mxu0
  %v182 = vadd.f32 %v54, %v181
  %v183 = vpop.f32.mrf.mxu0
  %v184 = vadd.f32 %v54, %v183
  %185 = vmatmul.bf16.gmra.mxu0 %v93
  %v186 = vpop.f32.mrf.mxu0
  %v187 = vadd.f32 %v54, %v186
  %v188 = vpop.f32.mrf.mxu0
  %v189 = vadd.f32 %v54, %v188
  %190 = vmatmul.bf16.gmra.mxu0 %v94
  %v191 = vpop.f32.mrf.mxu0
  %v192 = vadd.f32 %v54, %v191
  %v193 = vpop.f32.mrf.mxu0
  %v194 = vadd.f32 %v54, %v193
  %195 = vmatmul.bf16.gmra.mxu0 %v95
  %v196 = vpop.f32.mrf.mxu0
  %v197 = vadd.f32 %v54, %v196
  %v198 = vpop.f32.mrf.mxu0
  %v199 = vadd.f32 %v54, %v198
  %200 = vdwg.mxu0
  %v201 = vadd.f32 %v162, %v164
  %v202 = vadd.f32 %v201, %v167
  %v203 = vadd.f32 %v202, %v169
  %v204 = vadd.f32 %v203, %v172
  %v205 = vadd.f32 %v204, %v174
  %v206 = vadd.f32 %v205, %v177
  %v207 = vadd.f32 %v206, %v179
  %v208 = vadd.f32 %v207, %v182
  %v209 = vadd.f32 %v208, %v184
  %v210 = vadd.f32 %v209, %v187
  %v211 = vadd.f32 %v210, %v189
  %v212 = vadd.f32 %v211, %v192
  %v213 = vadd.f32 %v212, %v194
  %v214 = vadd.f32 %v213, %v197
  %v215 = vadd.f32 %v214, %v199
  %v216 = vrot.slane %v215, 4
  %v217 = vadd.f32 %v215, %v216
  %v218 = vrot.slane %v217, 2
  %v219 = vadd.f32 %v217, %v218
  %v220 = vrot.slane %v219, 1
  %v221 = vadd.f32 %v219, %v220
  %v222 = vmul.f32 %v221, 0.0078125
  %v223 = vsub.f32 %v162, %v222
  %v224 = vsub.f32 %v164, %v222
  %v225 = vsub.f32 %v167, %v222
  %v226 = vsub.f32 %v169, %v222
  %v227 = vsub.f32 %v172, %v222
  %v228 = vsub.f32 %v174, %v222
  %v229 = vsub.f32 %v177, %v222
  %v230 = vsub.f32 %v179, %v222
  %v231 = vsub.f32 %v182, %v222
  %v232 = vsub.f32 %v184, %v222
  %v233 = vsub.f32 %v187, %v222
  %v234 = vsub.f32 %v189, %v222
  %v235 = vsub.f32 %v192, %v222
  %v236 = vsub.f32 %v194, %v222
  %v237 = vsub.f32 %v197, %v222
  %v238 = vsub.f32 %v199, %v222
  %v239 = vmul.f32 %v223, %v223
  %v240 = vmul.f32 %v224, %v224
  %v241 = vmul.f32 %v225, %v225
  %v242 = vmul.f32 %v226, %v226
  %v243 = vmul.f32 %v227, %v227
  %v244 = vmul.f32 %v228, %v228
  %v245 = vmul.f32 %v229, %v229
  %v246 = vmul.f32 %v230, %v230
  %v247 = vmul.f32 %v231, %v231
  %v248 = vmul.f32 %v232, %v232
  %v249 = vmul.f32 %v233, %v233
  %v250 = vmul.f32 %v234, %v234
  %v251 = vmul.f32 %v235, %v235
  %v252 = vmul.f32 %v236, %v236
  %v253 = vmul.f32 %v237, %v237
  %v254 = vmul.f32 %v238, %v238
  %v255 = vadd.f32 %v239, %v240
  %v256 = vadd.f32 %v255, %v241
  %v257 = vadd.f32 %v256, %v242
  %v258 = vadd.f32 %v257, %v243
  %v259 = vadd.f32 %v258, %v244
  %v260 = vadd.f32 %v259, %v245
  %v261 = vadd.f32 %v260, %v246
  %v262 = vadd.f32 %v261, %v247
  %v263 = vadd.f32 %v262, %v248
  %v264 = vadd.f32 %v263, %v249
  %v265 = vadd.f32 %v264, %v250
  %v266 = vadd.f32 %v265, %v251
  %v267 = vadd.f32 %v266, %v252
  %v268 = vadd.f32 %v267, %v253
  %v269 = vadd.f32 %v268, %v254
  %v270 = vrot.slane %v269, 4
  %v271 = vadd.f32 %v269, %v270
  %v272 = vrot.slane %v271, 2
  %v273 = vadd.f32 %v271, %v272
  %v274 = vrot.slane %v273, 1
  %v275 = vadd.f32 %v273, %v274
  %v276 = vmul.f32 %v275, 0.0078125
  %v277 = vadd.f32 %v276, 1e-05
  %v278 = vrsqrt.pop %v277
  %v279 = vmul.f32 %v278, %v277
  %v280 = vmul.f32 %v279, %v278
  %v281 = vmul.f32 0.5, %v280
  %v282 = vsub.f32 1.5, %v281
  %v283 = vmul.f32 %v278, %v282
  %vm284 = vweird.f32 %v277
  %vm285 = vweird.f32 %v278
  %vm286 = vmor %vm284, %vm285
  %v287 = vsel %vm286, %v278, %v283
  %v288 = vmul.f32 %v223, %v287
  %v289 = vmul.f32 %v224, %v287
  %v290 = vmul.f32 %v225, %v287
  %v291 = vmul.f32 %v226, %v287
  %v292 = vmul.f32 %v227, %v287
  %v293 = vmul.f32 %v228, %v287
  %v294 = vmul.f32 %v229, %v287
  %v295 = vmul.f32 %v230, %v287
  %v296 = vmul.f32 %v231, %v287
  %v297 = vmul.f32 %v232, %v287
  %v298 = vmul.f32 %v233, %v287
  %v299 = vmul.f32 %v234, %v287
  %v300 = vmul.f32 %v235, %v287
  %v301 = vmul.f32 %v236, %v287
  %v302 = vmul.f32 %v237, %v287
  %v303 = vmul.f32 %v238, %v287
  %v304 = vld [vmem:[%s3] sm:$0x1]
  %v306 = vperm.slane %v304, 0
  %v308 = vmul.f32 %v288, %v306
  %v309 = vmul.f32 %v289, %v306
  %v310 = vmul.f32 %v290, %v306
  %v311 = vmul.f32 %v291, %v306
  %v312 = vmul.f32 %v292, %v306
  %v313 = vmul.f32 %v293, %v306
  %v314 = vmul.f32 %v294, %v306
  %v315 = vmul.f32 %v295, %v306
  %v316 = vmul.f32 %v296, %v306
  %v317 = vmul.f32 %v297, %v306
  %v318 = vmul.f32 %v298, %v306
  %v319 = vmul.f32 %v299, %v306
  %v320 = vmul.f32 %v300, %v306
  %v321 = vmul.f32 %v301, %v306
  %v322 = vmul.f32 %v302, %v306
  %v323 = vmul.f32 %v303, %v306
  %v324 = vld [vmem:[%s4] sm:$0x1]
  %v326 = vperm.slane %v324, 0
  %v328 = vadd.f32 %v308, %v326
  %v329 = vadd.f32 %v309, %v326
  %v330 = vadd.f32 %v310, %v326
  %v331 = vadd.f32 %v311, %v326
  %v332 = vadd.f32 %v312, %v326
  %v333 = vadd.f32 %v313, %v326
  %v334 = vadd.f32 %v314, %v326
  %v335 = vadd.f32 %v315, %v326
  %v336 = vadd.f32 %v316, %v326
  %v337 = vadd.f32 %v317, %v326
  %v338 = vadd.f32 %v318, %v326
  %v339 = vadd.f32 %v319, %v326
  %v340 = vadd.f32 %v320, %v326
  %v341 = vadd.f32 %v321, %v326
  %v342 = vadd.f32 %v322, %v326
  %v343 = vadd.f32 %v323, %v326
  %vm344 = vcmp.ge.f32.partialorder %v328, 0.0
  %vm345 = vcmp.ge.f32.partialorder %v329, 0.0
  %vm346 = vcmp.ge.f32.partialorder %v330, 0.0
  %vm347 = vcmp.ge.f32.partialorder %v331, 0.0
  %vm348 = vcmp.ge.f32.partialorder %v332, 0.0
  %vm349 = vcmp.ge.f32.partialorder %v333, 0.0
  %vm350 = vcmp.ge.f32.partialorder %v334, 0.0
  %vm351 = vcmp.ge.f32.partialorder %v335, 0.0
  %vm352 = vcmp.ge.f32.partialorder %v336, 0.0
  %vm353 = vcmp.ge.f32.partialorder %v337, 0.0
  %vm354 = vcmp.ge.f32.partialorder %v338, 0.0
  %vm355 = vcmp.ge.f32.partialorder %v339, 0.0
  %vm356 = vcmp.ge.f32.partialorder %v340, 0.0
  %vm357 = vcmp.ge.f32.partialorder %v341, 0.0
  %vm358 = vcmp.ge.f32.partialorder %v342, 0.0
  %vm359 = vcmp.ge.f32.partialorder %v343, 0.0
  %v360 = vmul.f32 %v328, 0.2
  %v361 = vmul.f32 %v329, 0.2
  %v362 = vmul.f32 %v330, 0.2
  %v363 = vmul.f32 %v331, 0.2
  %v364 = vmul.f32 %v332, 0.2
  %v365 = vmul.f32 %v333, 0.2
  %v366 = vmul.f32 %v334, 0.2
  %v367 = vmul.f32 %v335, 0.2
  %v368 = vmul.f32 %v336, 0.2
  %v369 = vmul.f32 %v337, 0.2
  %v370 = vmul.f32 %v338, 0.2
  %v371 = vmul.f32 %v339, 0.2
  %v372 = vmul.f32 %v340, 0.2
  %v373 = vmul.f32 %v341, 0.2
  %v374 = vmul.f32 %v342, 0.2
  %v375 = vmul.f32 %v343, 0.2
  %v376 = vsel %vm344, %v328, %v360
  %v377 = vsel %vm345, %v329, %v361
  %v378 = vsel %vm346, %v330, %v362
  %v379 = vsel %vm347, %v331, %v363
  %v380 = vsel %vm348, %v332, %v364
  %v381 = vsel %vm349, %v333, %v365
  %v382 = vsel %vm350, %v334, %v366
  %v383 = vsel %vm351, %v335, %v367
  %v384 = vsel %vm352, %v336, %v368
  %v385 = vsel %vm353, %v337, %v369
  %v386 = vsel %vm354, %v338, %v370
  %v387 = vsel %vm355, %v339, %v371
  %v388 = vsel %vm356, %v340, %v372
  %v389 = vsel %vm357, %v341, %v373
  %v390 = vsel %vm358, %v342, %v374
  %v391 = vsel %vm359, %v343, %v375
  %v392 = vpack.c.bf16 %v376, %v376
  %v393 = vpack.c.bf16 %v377, %v377
  %v394 = vpack.c.bf16 %v378, %v378
  %v395 = vpack.c.bf16 %v379, %v379
  %v396 = vpack.c.bf16 %v380, %v380
  %v397 = vpack.c.bf16 %v381, %v381
  %v398 = vpack.c.bf16 %v382, %v382
  %v399 = vpack.c.bf16 %v383, %v383
  %v400 = vpack.c.bf16 %v384, %v384
  %v401 = vpack.c.bf16 %v385, %v385
  %v402 = vpack.c.bf16 %v386, %v386
  %v403 = vpack.c.bf16 %v387, %v387
  %v404 = vpack.c.bf16 %v388, %v388
  %v405 = vpack.c.bf16 %v389, %v389
  %v406 = vpack.c.bf16 %v390, %v390
  %v407 = vpack.c.bf16 %v391, %v391
  %408 = vst [vmem:[%s5] sm:$0xf] %v392
  %409 = vst [vmem:[%s5 + $0x4] sm:$0xf] %v393
  %410 = vst [vmem:[%s5 + $0x8] sm:$0xf] %v394
  %411 = vst [vmem:[%s5 + $0xc] sm:$0xf] %v395
  %412 = vst [vmem:[%s5 + $0x10] sm:$0xf] %v396
  %413 = vst [vmem:[%s5 + $0x14] sm:$0xf] %v397
  %414 = vst [vmem:[%s5 + $0x18] sm:$0xf] %v398
  %415 = vst [vmem:[%s5 + $0x1c] sm:$0xf] %v399
  %416 = vst [vmem:[%s5 + $0x20] sm:$0xf] %v400
  %417 = vst [vmem:[%s5 + $0x24] sm:$0xf] %v401
  %418 = vst [vmem:[%s5 + $0x28] sm:$0xf] %v402
  %419 = vst [vmem:[%s5 + $0x2c] sm:$0xf] %v403
  %420 = vst [vmem:[%s5 + $0x30] sm:$0xf] %v404
  %421 = vst [vmem:[%s5 + $0x34] sm:$0xf] %v405
  %422 = vst [vmem:[%s5 + $0x38] sm:$0xf] %v406
  %423 = vst [vmem:[%s5 + $0x3c] sm:$0xf] %v407
  // Predicated region
  $region22: #{discriminator_forward.5} parent=0 // pred_check
    _
  $region23: #{discriminator_forward.5} parent=0 // pred_check_branch
    %425 = sbr.rel (0) target = $region25
  $region24: #{discriminator_forward.5} parent=0 // pred_region
    _
  $region25: #{discriminator_forward.5} parent=0 // pred_fallthru
    _
  // Predicated region
  $region26: #{discriminator_forward.5} parent=0 // pred_check
    _
  $region27: #{discriminator_forward.5} parent=0 // pred_check_branch
    %427 = sbr.rel (0) target = $region29
  $region28: #{discriminator_forward.5} parent=0 // pred_region
    _
  $region29: #{discriminator_forward.5} parent=0 // pred_fallthru
    _

// kernel: discriminator_forward.6
$region0: #{discriminator_forward.6}
  #allocation0 [shape = 'u32[]', space=smem, size = 0x4, offset = 0x4, fixed_abs, tag = 'smem constant byte address 0x4 - core index']
  #allocation1 [shape = 'u32[72,128]{1,0:T(1,128)}', space=vmem, size = 0x9000, scoped, tag = 'internal scratch']
  %s0 = inlined_call_operand.vmem [shape: bf16[32,256], index: 0, kind: input, shape index: {}]
  %s1 = inlined_call_operand.vmem [shape: bf16[256,128], index: 1, kind: input, shape index: {}]
  %s2 = inlined_call_operand.vmem [shape: f32[1,128], index: 2, kind: input, shape index: {}]
  %s3 = inlined_call_operand.vmem [shape: f32[1,128], index: 3, kind: input, shape index: {}]
  %s4 = inlined_call_operand.vmem [shape: f32[1,128], index: 4, kind: input, shape index: {}]
  %s5 = inlined_call_operand.vmem [shape: bf16[32,128], index: 5, kind: output, shape index: {}]
  %s6 = sld [smem:[#allocation0]]
  $region30: #{discriminator_forward.6} parent=0
    _
  %s8 = ssub.s32 1, %s6
  %s9 = scalar_select 0, %s8, %s6
  // Predicated region
  $region2: #{discriminator_forward.6} parent=0 // pred_check
    _
  $region3: #{discriminator_forward.6} parent=0 // pred_check_branch
    %11 = sbr.rel (0) target = $region5
  $region4: #{discriminator_forward.6} parent=0 // pred_region
    _
  $region5: #{discriminator_forward.6} parent=0 // pred_fallthru
    _
  // Predicated region
  $region6: #{discriminator_forward.6} parent=0 // pred_check
    _
  $region7: #{discriminator_forward.6} parent=0 // pred_check_branch
    %13 = sbr.rel (0) target = $region9
  $region8: #{discriminator_forward.6} parent=0 // pred_region
    _
  $region9: #{discriminator_forward.6} parent=0 // pred_fallthru
    _
  // Predicated region
  $region10: #{discriminator_forward.6} parent=0 // pred_check
    _
  $region11: #{discriminator_forward.6} parent=0 // pred_check_branch
    %15 = sbr.rel (0) target = $region13
  $region12: #{discriminator_forward.6} parent=0 // pred_region
    _
  $region13: #{discriminator_forward.6} parent=0 // pred_fallthru
    _
  // Predicated region
  $region14: #{discriminator_forward.6} parent=0 // pred_check
    _
  $region15: #{discriminator_forward.6} parent=0 // pred_check_branch
    %17 = sbr.rel (0) target = $region17
  $region16: #{discriminator_forward.6} parent=0 // pred_region
    _
  $region17: #{discriminator_forward.6} parent=0 // pred_fallthru
    _
  // Predicated region
  $region18: #{discriminator_forward.6} parent=0 // pred_check
    _
  $region19: #{discriminator_forward.6} parent=0 // pred_check_branch
    %19 = sbr.rel (0) target = $region21
  $region20: #{discriminator_forward.6} parent=0 // pred_region
    _
  $region21: #{discriminator_forward.6} parent=0 // pred_fallthru
    _
  %v20 = vld [vmem:[%s0] sm:$0xff]
  %v21 = vld [vmem:[%s0 + $0x8] sm:$0xff]
  %v22 = vld [vmem:[%s0 + $0x10] sm:$0xff]
  %v23 = vld [vmem:[%s0 + $0x18] sm:$0xff]
  %v24 = vld [vmem:[%s1] sm:$0xf]
  %v25 = vld [vmem:[%s1 + $0x4] sm:$0xf]
  %v26 = vld [vmem:[%s1 + $0x8] sm:$0xf]
  %v27 = vld [vmem:[%s1 + $0xc] sm:$0xf]
  %v28 = vld [vmem:[%s1 + $0x10] sm:$0xf]
  %v29 = vld [vmem:[%s1 + $0x14] sm:$0xf]
  %v30 = vld [vmem:[%s1 + $0x18] sm:$0xf]
  %v31 = vld [vmem:[%s1 + $0x1c] sm:$0xf]
  %v32 = vld [vmem:[%s1 + $0x20] sm:$0xf]
  %v33 = vld [vmem:[%s1 + $0x24] sm:$0xf]
  %v34 = vld [vmem:[%s1 + $0x28] sm:$0xf]
  %v35 = vld [vmem:[%s1 + $0x2c] sm:$0xf]
  %v36 = vld [vmem:[%s1 + $0x30] sm:$0xf]
  %v37 = vld [vmem:[%s1 + $0x34] sm:$0xf]
  %v38 = vld [vmem:[%s1 + $0x38] sm:$0xf]
  %v39 = vld [vmem:[%s1 + $0x3c] sm:$0xf]
  %v40 = vld [vmem:[%s1 + $0x40] sm:$0xf]
  %v41 = vld [vmem:[%s1 + $0x44] sm:$0xf]
  %v42 = vld [vmem:[%s1 + $0x48] sm:$0xf]
  %v43 = vld [vmem:[%s1 + $0x4c] sm:$0xf]
  %v44 = vld [vmem:[%s1 + $0x50] sm:$0xf]
  %v45 = vld [vmem:[%s1 + $0x54] sm:$0xf]
  %v46 = vld [vmem:[%s1 + $0x58] sm:$0xf]
  %v47 = vld [vmem:[%s1 + $0x5c] sm:$0xf]
  %v48 = vld [vmem:[%s1 + $0x60] sm:$0xf]
  %v49 = vld [vmem:[%s1 + $0x64] sm:$0xf]
  %v50 = vld [vmem:[%s1 + $0x68] sm:$0xf]
  %v51 = vld [vmem:[%s1 + $0x6c] sm:$0xf]
  %v52 = vld [vmem:[%s1 + $0x70] sm:$0xf]
  %v53 = vld [vmem:[%s1 + $0x74] sm:$0xf]
  %v54 = vld [vmem:[%s1 + $0x78] sm:$0xf]
  %v55 = vld [vmem:[%s1 + $0x7c] sm:$0xf]
  %v56 = vld [vmem:[%s2] sm:$0x1]
  %v58 = vperm.slane %v56, 0
  %v64 = vunpack.c.l.b16 %v20
  %v65 = vunpack.c.h.b16 %v20
  %v66 = vunpack.c.l.b16 %v21
  %v67 = vunpack.c.h.b16 %v21
  %v68 = vunpack.c.l.b16 %v22
  %v69 = vunpack.c.h.b16 %v22
  %v70 = vunpack.c.l.b16 %v23
  %v71 = vunpack.c.h.b16 %v23
  %v72 = vpack.c.b16 %v66, %v64
  %v73 = vpack.c.b16 %v67, %v65
  %v74 = vpack.c.b16 %v70, %v68
  %v75 = vpack.c.b16 %v71, %v69
  %v112 = vunpack.c.l.b16 %v24
  %v113 = vunpack.c.l.b16 %v25
  %v114 = vunpack.c.l.b16 %v26
  %v115 = vunpack.c.l.b16 %v27
  %v116 = vunpack.c.l.b16 %v28
  %v117 = vunpack.c.l.b16 %v29
  %v118 = vunpack.c.l.b16 %v30
  %v119 = vunpack.c.l.b16 %v31
  %v120 = vunpack.c.l.b16 %v32
  %v121 = vunpack.c.l.b16 %v33
  %v122 = vunpack.c.l.b16 %v34
  %v123 = vunpack.c.l.b16 %v35
  %v124 = vunpack.c.l.b16 %v36
  %v125 = vunpack.c.l.b16 %v37
  %v126 = vunpack.c.l.b16 %v38
  %v127 = vunpack.c.l.b16 %v39
  %v128 = vunpack.c.l.b16 %v40
  %v129 = vunpack.c.l.b16 %v41
  %v130 = vunpack.c.l.b16 %v42
  %v131 = vunpack.c.l.b16 %v43
  %v132 = vunpack.c.l.b16 %v44
  %v133 = vunpack.c.l.b16 %v45
  %v134 = vunpack.c.l.b16 %v46
  %v135 = vunpack.c.l.b16 %v47
  %v136 = vunpack.c.l.b16 %v48
  %v137 = vunpack.c.l.b16 %v49
  %v138 = vunpack.c.l.b16 %v50
  %v139 = vunpack.c.l.b16 %v51
  %v140 = vunpack.c.l.b16 %v52
  %v141 = vunpack.c.l.b16 %v53
  %v142 = vunpack.c.l.b16 %v54
  %v143 = vunpack.c.l.b16 %v55
  %v144 = vpack.c.b16 %v113, %v112
  %v145 = vpack.c.b16 %v115, %v114
  %v146 = vpack.c.b16 %v117, %v116
  %v147 = vpack.c.b16 %v119, %v118
  %v148 = vpack.c.b16 %v121, %v120
  %v149 = vpack.c.b16 %v123, %v122
  %v150 = vpack.c.b16 %v125, %v124
  %v151 = vpack.c.b16 %v127, %v126
  %v152 = vpack.c.b16 %v129, %v128
  %v153 = vpack.c.b16 %v131, %v130
  %v154 = vpack.c.b16 %v133, %v132
  %v155 = vpack.c.b16 %v135, %v134
  %v156 = vpack.c.b16 %v137, %v136
  %v157 = vpack.c.b16 %v139, %v138
  %v158 = vpack.c.b16 %v141, %v140
  %v159 = vpack.c.b16 %v143, %v142
  %176 = vmatpush.bf16.msra.mxu0 %v151
  %177 = vmatpush.bf16.msra.mxu0 %v150
  %178 = vmatpush.bf16.msra.mxu0 %v149
  %179 = vmatpush.bf16.msra.mxu0 %v148
  %180 = vmatpush.bf16.msra.mxu0 %v147
  %181 = vmatpush.bf16.msra.mxu0 %v146
  %182 = vmatpush.bf16.msra.mxu0 %v145
  %183 = vmatpush.bf16.msra.mxu0 %v144
  %184 = vmatmul.bf16.gmra.mxu0 %v72
  %v185 = vpop.f32.mrf.mxu0
  %v186 = vadd.f32 %v58, %v185
  %v187 = vpop.f32.mrf.mxu0
  %v188 = vadd.f32 %v58, %v187
  %189 = vmatmul.bf16.gmra.mxu0 %v74
  %v190 = vpop.f32.mrf.mxu0
  %v191 = vadd.f32 %v58, %v190
  %v192 = vpop.f32.mrf.mxu0
  %v193 = vadd.f32 %v58, %v192
  %194 = vdwg.mxu0
  %195 = vmatpush.bf16.msra.mxu0 %v159
  %196 = vmatpush.bf16.msra.mxu0 %v158
  %197 = vmatpush.bf16.msra.mxu0 %v157
  %198 = vmatpush.bf16.msra.mxu0 %v156
  %199 = vmatpush.bf16.msra.mxu0 %v155
  %200 = vmatpush.bf16.msra.mxu0 %v154
  %201 = vmatpush.bf16.msra.mxu0 %v153
  %202 = vmatpush.bf16.msra.mxu0 %v152
  %203 = vmatmul.bf16.gmra.mxu0 %v73
  %v204 = vpop.f32.mrf.mxu0
  %v205 = vadd.f32 %v186, %v204
  %v206 = vpop.f32.mrf.mxu0
  %v207 = vadd.f32 %v188, %v206
  %208 = vmatmul.bf16.gmra.mxu0 %v75
  %v209 = vpop.f32.mrf.mxu0
  %v210 = vadd.f32 %v191, %v209
  %v211 = vpop.f32.mrf.mxu0
  %v212 = vadd.f32 %v193, %v211
  %213 = vdwg.mxu0
  %v214 = vadd.f32 %v205, %v207
  %v215 = vadd.f32 %v214, %v210
  %v216 = vadd.f32 %v215, %v212
  %v217 = vrot.slane %v216, 4
  %v218 = vadd.f32 %v216, %v217
  %v219 = vrot.slane %v218, 2
  %v220 = vadd.f32 %v218, %v219
  %v221 = vrot.slane %v220, 1
  %v222 = vadd.f32 %v220, %v221
  %v223 = vmul.f32 %v222, 0.03125
  %v224 = vsub.f32 %v205, %v223
  %v225 = vsub.f32 %v207, %v223
  %v226 = vsub.f32 %v210, %v223
  %v227 = vsub.f32 %v212, %v223
  %v228 = vmul.f32 %v224, %v224
  %v229 = vmul.f32 %v225, %v225
  %v230 = vmul.f32 %v226, %v226
  %v231 = vmul.f32 %v227, %v227
  %v232 = vadd.f32 %v228, %v229
  %v233 = vadd.f32 %v232, %v230
  %v234 = vadd.f32 %v233, %v231
  %v235 = vrot.slane %v234, 4
  %v236 = vadd.f32 %v234, %v235
  %v237 = vrot.slane %v236, 2
  %v238 = vadd.f32 %v236, %v237
  %v239 = vrot.slane %v238, 1
  %v240 = vadd.f32 %v238, %v239
  %v241 = vmul.f32 %v240, 0.03125
  %v242 = vadd.f32 %v241, 1e-05
  %v243 = vrsqrt.pop %v242
  %v244 = vmul.f32 %v243, %v242
  %v245 = vmul.f32 %v244, %v243
  %v246 = vmul.f32 0.5, %v245
  %v247 = vsub.f32 1.5, %v246
  %v248 = vmul.f32 %v243, %v247
  %vm249 = vweird.f32 %v242
  %vm250 = vweird.f32 %v243
  %vm251 = vmor %vm249, %vm250
  %v252 = vsel %vm251, %v243, %v248
  %v253 = vmul.f32 %v224, %v252
  %v254 = vmul.f32 %v225, %v252
  %v255 = vmul.f32 %v226, %v252
  %v256 = vmul.f32 %v227, %v252
  %v257 = vld [vmem:[%s3] sm:$0x1]
  %v259 = vperm.slane %v257, 0
  %v261 = vmul.f32 %v253, %v259
  %v262 = vmul.f32 %v254, %v259
  %v263 = vmul.f32 %v255, %v259
  %v264 = vmul.f32 %v256, %v259
  %v265 = vld [vmem:[%s4] sm:$0x1]
  %v267 = vperm.slane %v265, 0
  %v269 = vadd.f32 %v261, %v267
  %v270 = vadd.f32 %v262, %v267
  %v271 = vadd.f32 %v263, %v267
  %v272 = vadd.f32 %v264, %v267
  %vm273 = vcmp.ge.f32.partialorder %v269, 0.0
  %vm274 = vcmp.ge.f32.partialorder %v270, 0.0
  %vm275 = vcmp.ge.f32.partialorder %v271, 0.0
  %vm276 = vcmp.ge.f32.partialorder %v272, 0.0
  %v277 = vmul.f32 %v269, 0.2
  %v278 = vmul.f32 %v270, 0.2
  %v279 = vmul.f32 %v271, 0.2
  %v280 = vmul.f32 %v272, 0.2
  %v281 = vsel %vm273, %v269, %v277
  %v282 = vsel %vm274, %v270, %v278
  %v283 = vsel %vm275, %v271, %v279
  %v284 = vsel %vm276, %v272, %v280
  %v285 = vpack.c.bf16 %v281, %v281
  %v286 = vpack.c.bf16 %v282, %v282
  %v287 = vpack.c.bf16 %v283, %v283
  %v288 = vpack.c.bf16 %v284, %v284
  %289 = vst [vmem:[%s5] sm:$0xf] %v285
  %290 = vst [vmem:[%s5 + $0x4] sm:$0xf] %v286
  %291 = vst [vmem:[%s5 + $0x8] sm:$0xf] %v287
  %292 = vst [vmem:[%s5 + $0xc] sm:$0xf] %v288
  // Predicated region
  $region22: #{discriminator_forward.6} parent=0 // pred_check
    _
  $region23: #{discriminator_forward.6} parent=0 // pred_check_branch
    %294 = sbr.rel (0) target = $region25
  $region24: #{discriminator_forward.6} parent=0 // pred_region
    _
  $region25: #{discriminator_forward.6} parent=0 // pred_fallthru
    _
  // Predicated region
  $region26: #{discriminator_forward.6} parent=0 // pred_check
    _
  $region27: #{discriminator_forward.6} parent=0 // pred_check_branch
    %296 = sbr.rel (0) target = $region29
  $region28: #{discriminator_forward.6} parent=0 // pred_region
    _
  $region29: #{discriminator_forward.6} parent=0 // pred_fallthru
    _

// kernel: discriminator_forward.7
$region0: #{discriminator_forward.7}
  #allocation0 [shape = 'u32[]', space=smem, size = 0x4, offset = 0x4, fixed_abs, tag = 'smem constant byte address 0x4 - core index']
  #allocation1 [shape = 'u32[72,128]{1,0:T(1,128)}', space=vmem, size = 0x9000, scoped, tag = 'internal scratch']
  %s0 = inlined_call_operand.vmem [shape: bf16[8,512], index: 0, kind: input, shape index: {}]
  %s1 = inlined_call_operand.vmem [shape: bf16[512,128], index: 1, kind: input, shape index: {}]
  %s2 = inlined_call_operand.vmem [shape: f32[1,128], index: 2, kind: input, shape index: {}]
  %s3 = inlined_call_operand.vmem [shape: f32[1,128], index: 3, kind: input, shape index: {}]
  %s4 = inlined_call_operand.vmem [shape: f32[1,128], index: 4, kind: input, shape index: {}]
  %s5 = inlined_call_operand.vmem [shape: f32[8,128], index: 5, kind: output, shape index: {}]
  %s6 = sld [smem:[#allocation0]]
  $region30: #{discriminator_forward.7} parent=0
    _
  %s8 = ssub.s32 1, %s6
  %s9 = scalar_select 0, %s8, %s6
  // Predicated region
  $region2: #{discriminator_forward.7} parent=0 // pred_check
    _
  $region3: #{discriminator_forward.7} parent=0 // pred_check_branch
    %11 = sbr.rel (0) target = $region5
  $region4: #{discriminator_forward.7} parent=0 // pred_region
    _
  $region5: #{discriminator_forward.7} parent=0 // pred_fallthru
    _
  // Predicated region
  $region6: #{discriminator_forward.7} parent=0 // pred_check
    _
  $region7: #{discriminator_forward.7} parent=0 // pred_check_branch
    %13 = sbr.rel (0) target = $region9
  $region8: #{discriminator_forward.7} parent=0 // pred_region
    _
  $region9: #{discriminator_forward.7} parent=0 // pred_fallthru
    _
  // Predicated region
  $region10: #{discriminator_forward.7} parent=0 // pred_check
    _
  $region11: #{discriminator_forward.7} parent=0 // pred_check_branch
    %15 = sbr.rel (0) target = $region13
  $region12: #{discriminator_forward.7} parent=0 // pred_region
    _
  $region13: #{discriminator_forward.7} parent=0 // pred_fallthru
    _
  // Predicated region
  $region14: #{discriminator_forward.7} parent=0 // pred_check
    _
  $region15: #{discriminator_forward.7} parent=0 // pred_check_branch
    %17 = sbr.rel (0) target = $region17
  $region16: #{discriminator_forward.7} parent=0 // pred_region
    _
  $region17: #{discriminator_forward.7} parent=0 // pred_fallthru
    _
  // Predicated region
  $region18: #{discriminator_forward.7} parent=0 // pred_check
    _
  $region19: #{discriminator_forward.7} parent=0 // pred_check_branch
    %19 = sbr.rel (0) target = $region21
  $region20: #{discriminator_forward.7} parent=0 // pred_region
    _
  $region21: #{discriminator_forward.7} parent=0 // pred_fallthru
    _
  %v20 = vld [vmem:[%s0] sm:$0xff]
  %v21 = vld [vmem:[%s0 + $0x8] sm:$0xff]
  %v22 = vld [vmem:[%s1] sm:$0xf]
  %v23 = vld [vmem:[%s1 + $0x4] sm:$0xf]
  %v24 = vld [vmem:[%s1 + $0x8] sm:$0xf]
  %v25 = vld [vmem:[%s1 + $0xc] sm:$0xf]
  %v26 = vld [vmem:[%s1 + $0x10] sm:$0xf]
  %v27 = vld [vmem:[%s1 + $0x14] sm:$0xf]
  %v28 = vld [vmem:[%s1 + $0x18] sm:$0xf]
  %v29 = vld [vmem:[%s1 + $0x1c] sm:$0xf]
  %v30 = vld [vmem:[%s1 + $0x20] sm:$0xf]
  %v31 = vld [vmem:[%s1 + $0x24] sm:$0xf]
  %v32 = vld [vmem:[%s1 + $0x28] sm:$0xf]
  %v33 = vld [vmem:[%s1 + $0x2c] sm:$0xf]
  %v34 = vld [vmem:[%s1 + $0x30] sm:$0xf]
  %v35 = vld [vmem:[%s1 + $0x34] sm:$0xf]
  %v36 = vld [vmem:[%s1 + $0x38] sm:$0xf]
  %v37 = vld [vmem:[%s1 + $0x3c] sm:$0xf]
  %v38 = vld [vmem:[%s1 + $0x40] sm:$0xf]
  %v39 = vld [vmem:[%s1 + $0x44] sm:$0xf]
  %v40 = vld [vmem:[%s1 + $0x48] sm:$0xf]
  %v41 = vld [vmem:[%s1 + $0x4c] sm:$0xf]
  %v42 = vld [vmem:[%s1 + $0x50] sm:$0xf]
  %v43 = vld [vmem:[%s1 + $0x54] sm:$0xf]
  %v44 = vld [vmem:[%s1 + $0x58] sm:$0xf]
  %v45 = vld [vmem:[%s1 + $0x5c] sm:$0xf]
  %v46 = vld [vmem:[%s1 + $0x60] sm:$0xf]
  %v47 = vld [vmem:[%s1 + $0x64] sm:$0xf]
  %v48 = vld [vmem:[%s1 + $0x68] sm:$0xf]
  %v49 = vld [vmem:[%s1 + $0x6c] sm:$0xf]
  %v50 = vld [vmem:[%s1 + $0x70] sm:$0xf]
  %v51 = vld [vmem:[%s1 + $0x74] sm:$0xf]
  %v52 = vld [vmem:[%s1 + $0x78] sm:$0xf]
  %v53 = vld [vmem:[%s1 + $0x7c] sm:$0xf]
  %v54 = vld [vmem:[%s1 + $0x80] sm:$0xf]
  %v55 = vld [vmem:[%s1 + $0x84] sm:$0xf]
  %v56 = vld [vmem:[%s1 + $0x88] sm:$0xf]
  %v57 = vld [vmem:[%s1 + $0x8c] sm:$0xf]
  %v58 = vld [vmem:[%s1 + $0x90] sm:$0xf]
  %v59 = vld [vmem:[%s1 + $0x94] sm:$0xf]
  %v60 = vld [vmem:[%s1 + $0x98] sm:$0xf]
  %v61 = vld [vmem:[%s1 + $0x9c] sm:$0xf]
  %v62 = vld [vmem:[%s1 + $0xa0] sm:$0xf]
  %v63 = vld [vmem:[%s1 + $0xa4] sm:$0xf]
  %v64 = vld [vmem:[%s1 + $0xa8] sm:$0xf]
  %v65 = vld [vmem:[%s1 + $0xac] sm:$0xf]
  %v66 = vld [vmem:[%s1 + $0xb0] sm:$0xf]
  %v67 = vld [vmem:[%s1 + $0xb4] sm:$0xf]
  %v68 = vld [vmem:[%s1 + $0xb8] sm:$0xf]
  %v69 = vld [vmem:[%s1 + $0xbc] sm:$0xf]
  %v70 = vld [vmem:[%s1 + $0xc0] sm:$0xf]
  %v71 = vld [vmem:[%s1 + $0xc4] sm:$0xf]
  %v72 = vld [vmem:[%s1 + $0xc8] sm:$0xf]
  %v73 = vld [vmem:[%s1 + $0xcc] sm:$0xf]
  %v74 = vld [vmem:[%s1 + $0xd0] sm:$0xf]
  %v75 = vld [vmem:[%s1 + $0xd4] sm:$0xf]
  %v76 = vld [vmem:[%s1 + $0xd8] sm:$0xf]
  %v77 = vld [vmem:[%s1 + $0xdc] sm:$0xf]
  %v78 = vld [vmem:[%s1 + $0xe0] sm:$0xf]
  %v79 = vld [vmem:[%s1 + $0xe4] sm:$0xf]
  %v80 = vld [vmem:[%s1 + $0xe8] sm:$0xf]
  %v81 = vld [vmem:[%s1 + $0xec] sm:$0xf]
  %v82 = vld [vmem:[%s1 + $0xf0] sm:$0xf]
  %v83 = vld [vmem:[%s1 + $0xf4] sm:$0xf]
  %v84 = vld [vmem:[%s1 + $0xf8] sm:$0xf]
  %v85 = vld [vmem:[%s1 + $0xfc] sm:$0xf]
  %v86 = vld [vmem:[%s2] sm:$0x1]
  %v88 = vperm.slane %v86, 0
  %v92 = vunpack.c.l.b16 %v20
  %v93 = vunpack.c.h.b16 %v20
  %v94 = vunpack.c.l.b16 %v21
  %v95 = vunpack.c.h.b16 %v21
  %v96 = vpack.c.b16 %v92, %v92
  %v97 = vpack.c.b16 %v93, %v93
  %v98 = vpack.c.b16 %v94, %v94
  %v99 = vpack.c.b16 %v95, %v95
  %v168 = vunpack.c.l.b16 %v22
  %v169 = vunpack.c.l.b16 %v23
  %v170 = vunpack.c.l.b16 %v24
  %v171 = vunpack.c.l.b16 %v25
  %v172 = vunpack.c.l.b16 %v26
  %v173 = vunpack.c.l.b16 %v27
  %v174 = vunpack.c.l.b16 %v28
  %v175 = vunpack.c.l.b16 %v29
  %v176 = vunpack.c.l.b16 %v30
  %v177 = vunpack.c.l.b16 %v31
  %v178 = vunpack.c.l.b16 %v32
  %v179 = vunpack.c.l.b16 %v33
  %v180 = vunpack.c.l.b16 %v34
  %v181 = vunpack.c.l.b16 %v35
  %v182 = vunpack.c.l.b16 %v36
  %v183 = vunpack.c.l.b16 %v37
  %v184 = vunpack.c.l.b16 %v38
  %v185 = vunpack.c.l.b16 %v39
  %v186 = vunpack.c.l.b16 %v40
  %v187 = vunpack.c.l.b16 %v41
  %v188 = vunpack.c.l.b16 %v42
  %v189 = vunpack.c.l.b16 %v43
  %v190 = vunpack.c.l.b16 %v44
  %v191 = vunpack.c.l.b16 %v45
  %v192 = vunpack.c.l.b16 %v46
  %v193 = vunpack.c.l.b16 %v47
  %v194 = vunpack.c.l.b16 %v48
  %v195 = vunpack.c.l.b16 %v49
  %v196 = vunpack.c.l.b16 %v50
  %v197 = vunpack.c.l.b16 %v51
  %v198 = vunpack.c.l.b16 %v52
  %v199 = vunpack.c.l.b16 %v53
  %v200 = vunpack.c.l.b16 %v54
  %v201 = vunpack.c.l.b16 %v55
  %v202 = vunpack.c.l.b16 %v56
  %v203 = vunpack.c.l.b16 %v57
  %v204 = vunpack.c.l.b16 %v58
  %v205 = vunpack.c.l.b16 %v59
  %v206 = vunpack.c.l.b16 %v60
  %v207 = vunpack.c.l.b16 %v61
  %v208 = vunpack.c.l.b16 %v62
  %v209 = vunpack.c.l.b16 %v63
  %v210 = vunpack.c.l.b16 %v64
  %v211 = vunpack.c.l.b16 %v65
  %v212 = vunpack.c.l.b16 %v66
  %v213 = vunpack.c.l.b16 %v67
  %v214 = vunpack.c.l.b16 %v68
  %v215 = vunpack.c.l.b16 %v69
  %v216 = vunpack.c.l.b16 %v70
  %v217 = vunpack.c.l.b16 %v71
  %v218 = vunpack.c.l.b16 %v72
  %v219 = vunpack.c.l.b16 %v73
  %v220 = vunpack.c.l.b16 %v74
  %v221 = vunpack.c.l.b16 %v75
  %v222 = vunpack.c.l.b16 %v76
  %v223 = vunpack.c.l.b16 %v77
  %v224 = vunpack.c.l.b16 %v78
  %v225 = vunpack.c.l.b16 %v79
  %v226 = vunpack.c.l.b16 %v80
  %v227 = vunpack.c.l.b16 %v81
  %v228 = vunpack.c.l.b16 %v82
  %v229 = vunpack.c.l.b16 %v83
  %v230 = vunpack.c.l.b16 %v84
  %v231 = vunpack.c.l.b16 %v85
  %v232 = vpack.c.b16 %v169, %v168
  %v233 = vpack.c.b16 %v171, %v170
  %v234 = vpack.c.b16 %v173, %v172
  %v235 = vpack.c.b16 %v175, %v174
  %v236 = vpack.c.b16 %v177, %v176
  %v237 = vpack.c.b16 %v179, %v178
  %v238 = vpack.c.b16 %v181, %v180
  %v239 = vpack.c.b16 %v183, %v182
  %v240 = vpack.c.b16 %v185, %v184
  %v241 = vpack.c.b16 %v187, %v186
  %v242 = vpack.c.b16 %v189, %v188
  %v243 = vpack.c.b16 %v191, %v190
  %v244 = vpack.c.b16 %v193, %v192
  %v245 = vpack.c.b16 %v195, %v194
  %v246 = vpack.c.b16 %v197, %v196
  %v247 = vpack.c.b16 %v199, %v198
  %v248 = vpack.c.b16 %v201, %v200
  %v249 = vpack.c.b16 %v203, %v202
  %v250 = vpack.c.b16 %v205, %v204
  %v251 = vpack.c.b16 %v207, %v206
  %v252 = vpack.c.b16 %v209, %v208
  %v253 = vpack.c.b16 %v211, %v210
  %v254 = vpack.c.b16 %v213, %v212
  %v255 = vpack.c.b16 %v215, %v214
  %v256 = vpack.c.b16 %v217, %v216
  %v257 = vpack.c.b16 %v219, %v218
  %v258 = vpack.c.b16 %v221, %v220
  %v259 = vpack.c.b16 %v223, %v222
  %v260 = vpack.c.b16 %v225, %v224
  %v261 = vpack.c.b16 %v227, %v226
  %v262 = vpack.c.b16 %v229, %v228
  %v263 = vpack.c.b16 %v231, %v230
  %296 = vmatpush.bf16.msra.mxu0 %v239
  %297 = vmatpush.bf16.msra.mxu0 %v238
  %298 = vmatpush.bf16.msra.mxu0 %v237
  %299 = vmatpush.bf16.msra.mxu0 %v236
  %300 = vmatpush.bf16.msra.mxu0 %v235
  %301 = vmatpush.bf16.msra.mxu0 %v234
  %302 = vmatpush.bf16.msra.mxu0 %v233
  %303 = vmatpush.bf16.msra.mxu0 %v232
  %304 = vmatmul.bf16.gmra.mxu0 %v96
  %v305 = vpop.f32.mrf.mxu0
  %v306 = vadd.f32 %v88, %v305
  %v307 = vpop.f32.mrf.mxu0
  %308 = vdwg.mxu0
  %309 = vmatpush.bf16.msra.mxu0 %v247
  %310 = vmatpush.bf16.msra.mxu0 %v246
  %311 = vmatpush.bf16.msra.mxu0 %v245
  %312 = vmatpush.bf16.msra.mxu0 %v244
  %313 = vmatpush.bf16.msra.mxu0 %v243
  %314 = vmatpush.bf16.msra.mxu0 %v242
  %315 = vmatpush.bf16.msra.mxu0 %v241
  %316 = vmatpush.bf16.msra.mxu0 %v240
  %317 = vmatmul.bf16.gmra.mxu0 %v97
  %v318 = vpop.f32.mrf.mxu0
  %v319 = vadd.f32 %v306, %v318
  %v320 = vpop.f32.mrf.mxu0
  %321 = vdwg.mxu0
  %322 = vmatpush.bf16.msra.mxu0 %v255
  %323 = vmatpush.bf16.msra.mxu0 %v254
  %324 = vmatpush.bf16.msra.mxu0 %v253
  %325 = vmatpush.bf16.msra.mxu0 %v252
  %326 = vmatpush.bf16.msra.mxu0 %v251
  %327 = vmatpush.bf16.msra.mxu0 %v250
  %328 = vmatpush.bf16.msra.mxu0 %v249
  %329 = vmatpush.bf16.msra.mxu0 %v248
  %330 = vmatmul.bf16.gmra.mxu0 %v98
  %v331 = vpop.f32.mrf.mxu0
  %v332 = vadd.f32 %v319, %v331
  %v333 = vpop.f32.mrf.mxu0
  %334 = vdwg.mxu0
  %335 = vmatpush.bf16.msra.mxu0 %v263
  %336 = vmatpush.bf16.msra.mxu0 %v262
  %337 = vmatpush.bf16.msra.mxu0 %v261
  %338 = vmatpush.bf16.msra.mxu0 %v260
  %339 = vmatpush.bf16.msra.mxu0 %v259
  %340 = vmatpush.bf16.msra.mxu0 %v258
  %341 = vmatpush.bf16.msra.mxu0 %v257
  %342 = vmatpush.bf16.msra.mxu0 %v256
  %343 = vmatmul.bf16.gmra.mxu0 %v99
  %v344 = vpop.f32.mrf.mxu0
  %v345 = vadd.f32 %v332, %v344
  %v346 = vpop.f32.mrf.mxu0
  %347 = vdwg.mxu0
  %v348 = vrot.slane %v345, 4
  %v349 = vadd.f32 %v345, %v348
  %v350 = vrot.slane %v349, 2
  %v351 = vadd.f32 %v349, %v350
  %v352 = vrot.slane %v351, 1
  %v353 = vadd.f32 %v351, %v352
  %v354 = vmul.f32 %v353, 0.125
  %v355 = vsub.f32 %v345, %v354
  %v356 = vmul.f32 %v355, %v355
  %v357 = vrot.slane %v356, 4
  %v358 = vadd.f32 %v356, %v357
  %v359 = vrot.slane %v358, 2
  %v360 = vadd.f32 %v358, %v359
  %v361 = vrot.slane %v360, 1
  %v362 = vadd.f32 %v360, %v361
  %v363 = vmul.f32 %v362, 0.125
  %v364 = vadd.f32 %v363, 1e-05
  %v365 = vrsqrt.pop %v364
  %v366 = vmul.f32 %v365, %v364
  %v367 = vmul.f32 %v366, %v365
  %v368 = vmul.f32 0.5, %v367
  %v369 = vsub.f32 1.5, %v368
  %v370 = vmul.f32 %v365, %v369
  %vm371 = vweird.f32 %v364
  %vm372 = vweird.f32 %v365
  %vm373 = vmor %vm371, %vm372
  %v374 = vsel %vm373, %v365, %v370
  %v375 = vmul.f32 %v355, %v374
  %v376 = vld [vmem:[%s3] sm:$0x1]
  %v378 = vperm.slane %v376, 0
  %v380 = vmul.f32 %v375, %v378
  %v381 = vld [vmem:[%s4] sm:$0x1]
  %v383 = vperm.slane %v381, 0
  %v385 = vadd.f32 %v380, %v383
  %vm386 = vcmp.ge.f32.partialorder %v385, 0.0
  %v387 = vmul.f32 %v385, 0.2
  %v388 = vsel %vm386, %v385, %v387
  %389 = vst [vmem:[%s5] sm:$0xff] %v388
  // Predicated region
  $region22: #{discriminator_forward.7} parent=0 // pred_check
    _
  $region23: #{discriminator_forward.7} parent=0 // pred_check_branch
    %391 = sbr.rel (0) target = $region25
  $region24: #{discriminator_forward.7} parent=0 // pred_region
    _
  $region25: #{discriminator_forward.7} parent=0 // pred_fallthru
    _
  // Predicated region
  $region26: #{discriminator_forward.7} parent=0 // pred_check
    _
  $region27: #{discriminator_forward.7} parent=0 // pred_check_branch
    %393 = sbr.rel (0) target = $region29
  $region28: #{discriminator_forward.7} parent=0 // pred_region
    _
  $region29: #{discriminator_forward.7} parent=0 // pred_fallthru
    _

</llo_original>
